<compile_context>
chip_gen: v5e
topology: v5e:2x2
jax: 0.10.0
libtpu: 0.0.40
codegen_flags: <defaults>
</compile_context>

<pallas_src>
import numpy as np
import jax
import jax.numpy as jnp
from jax import lax
from jax.experimental import pallas as pl
from jax.experimental.pallas import tpu as pltpu

PAD = 0


# ----------------------------- Pallas kernel ---------------------------------
def gru_encoder_kernel(gi_ref, len_ref, h0_ref, whh_ref, bhhn_ref,
                       out_ref, hid_ref, h_scr):
    """One grid step processes a block of TT timesteps of the GRU recurrence.

    gi_ref   : (TT, Bp, 3*Hp) f32  precomputed x@W_ih^T + folded biases (gate-major, Hp slots)
    len_ref  : (Bp, 1)        i32  sequence lengths (0 for padded batch rows)
    h0_ref   : (Bp, Hp)       f32  initial hidden state
    whh_ref  : (Hp, 3*Hp)     f32/bf16  fused hidden-to-hidden weights (r|z|n slots)
    bhhn_ref : (1, Hp)        f32  hidden bias of the n gate (kept inside tanh's r*(...) term)
    out_ref  : (TT, Bp, Hp)   f32  per-timestep outputs (0 at padded positions)
    hid_ref  : (Bp, Hp)       f32  hidden state after the last grid block
    h_scr    : (Bp, Hp)       f32  VMEM-resident hidden state carried across grid steps
    """
    blk = pl.program_id(0)
    TT = out_ref.shape[0]
    Hp = out_ref.shape[2]

    @pl.when(blk == 0)
    def _():
        h_scr[...] = h0_ref[...]

    lens = len_ref[...]          # (Bp, 1) int32
    whh = whh_ref[...]           # (Hp, 3*Hp), loaded once per grid block
    bhh_n = bhhn_ref[...]        # (1, Hp)
    t0 = blk * TT

    def step(i, h):
        gi = gi_ref[i]                                                   # (Bp, 3*Hp)
        # single fused MXU matmul for all three gates
        gh = jnp.dot(h.astype(whh.dtype), whh,
                     preferred_element_type=jnp.float32)                 # (Bp, 3*Hp)
        # lane-aligned gate slices (Hp is a multiple of 128)
        r = jax.nn.sigmoid(gi[:, 0:Hp] + gh[:, 0:Hp])
        z = jax.nn.sigmoid(gi[:, Hp:2 * Hp] + gh[:, Hp:2 * Hp])
        n = jnp.tanh(gi[:, 2 * Hp:] + r * (gh[:, 2 * Hp:] + bhh_n))
        h_new = (1.0 - z) * n + z * h

        # packed-sequence semantics: emit / update only where t < length[b]
        valid = (t0 + i) < lens                                          # (Bp, 1) bool
        out_ref[i] = jnp.where(valid, h_new, 0.0)                        # padded -> 0
        return jnp.where(valid, h_new, h)                                # freeze after length

    h_final = lax.fori_loop(0, TT, step, h_scr[...], unroll=True)
    h_scr[...] = h_final
    hid_ref[...] = h_final


# ------------------------------ wrapper ---------------------------------------
def encoder_forward(batch_X, input_lengths, emb_w, w_ih, w_hh, b_ih, b_hh,
                    hidden=None, *, block_t=16, matmul_dtype=jnp.float32):
    """batch_X: (T, B) int32; input_lengths: (B,) (sorted descending, as required by
    pack_padded_sequence).  Returns (output (T, B, H), hidden (1, B, H))."""
    T, B = batch_X.shape
    H = emb_w.shape[1]
    f32 = jnp.float32

    # lane/sublane-dense padded sizes
    Hp = max(128, ((H + 127) // 128) * 128)
    Bp = max(8, ((B + 7) // 8) * 8)
    TT = max(1, min(int(block_t), T))
    Tp = ((T + TT - 1) // TT) * TT
    n_blk = Tp // TT

    # --- glue (plain XLA): embedding gather + hoisted input-to-hidden projection ---
    emb = jnp.take(emb_w.astype(f32), batch_X, axis=0)                  # (T, B, H)
    w_ih_t = jnp.transpose(w_ih.astype(f32))                            # (H, 3H)
    if matmul_dtype == jnp.bfloat16:
        gi = jnp.dot(emb.reshape(T * B, H).astype(jnp.bfloat16),
                     w_ih_t.astype(jnp.bfloat16),
                     preferred_element_type=f32)                        # (T*B, 3H)
    else:
        gi = jnp.dot(emb.reshape(T * B, H), w_ih_t,
                     preferred_element_type=f32)
    # fold b_ih (all gates) and b_hh (r, z gates) into the precomputed term;
    # the n-gate hidden bias must stay inside r * (.) so it is passed to the kernel.
    bias_fold = b_ih.astype(f32) + jnp.concatenate(
        [b_hh[:2 * H].astype(f32), jnp.zeros((H,), f32)])
    gi = (gi + bias_fold).reshape(T, B, 3, H)

    # scatter gates into lane-aligned Hp-wide slots -> (Tp, Bp, 3*Hp)
    gi_p = jnp.zeros((Tp, Bp, 3, Hp), f32).at[:T, :B, :, :H].set(gi)
    gi_p = gi_p.reshape(Tp, Bp, 3 * Hp)

    # fused, padded W_hh^T : (Hp, 3*Hp) with gate g occupying columns [g*Hp, g*Hp+H)
    whh_io = jnp.transpose(w_hh.astype(f32).reshape(3, H, H), (2, 0, 1))  # (in, gate, out)
    whh_p = jnp.zeros((Hp, 3, Hp), f32).at[:H, :, :H].set(whh_io)
    whh_p = whh_p.reshape(Hp, 3 * Hp).astype(matmul_dtype)

    bhh_n = jnp.zeros((1, Hp), f32).at[0, :H].set(b_hh[2 * H:].astype(f32))

    lens_p = jnp.zeros((Bp, 1), jnp.int32).at[:B, 0].set(
        jnp.asarray(input_lengths, jnp.int32))
    h0_p = jnp.zeros((Bp, Hp), f32)
    if hidden is not None:
        h0_p = h0_p.at[:B, :H].set(jnp.asarray(hidden, f32).reshape(B, H))

    out_p, hid_p = pl.pallas_call(
        gru_encoder_kernel,
        out_shape=(jax.ShapeDtypeStruct((Tp, Bp, Hp), f32),
                   jax.ShapeDtypeStruct((Bp, Hp), f32)),
        grid_spec=pltpu.PrefetchScalarGridSpec(
            num_scalar_prefetch=0,
            grid=(n_blk,),
            in_specs=[
                pl.BlockSpec((TT, Bp, 3 * Hp), lambda b: (b, 0, 0)),   # gi block (TT steps)
                pl.BlockSpec((Bp, 1), lambda b: (0, 0)),               # lengths
                pl.BlockSpec((Bp, Hp), lambda b: (0, 0)),              # h0
                pl.BlockSpec((Hp, 3 * Hp), lambda b: (0, 0)),          # fused W_hh
                pl.BlockSpec((1, Hp), lambda b: (0, 0)),               # b_hh (n gate)
            ],
            out_specs=[
                pl.BlockSpec((TT, Bp, Hp), lambda b: (b, 0, 0)),       # output block
                pl.BlockSpec((Bp, Hp), lambda b: (0, 0)),              # final hidden
            ],
            scratch_shapes=[pltpu.VMEM((Bp, Hp), f32)],
        ),
        compiler_params=pltpu.CompilerParams(
            dimension_semantics=("arbitrary",)),
    )(gi_p, lens_p, h0_p, whh_p, bhh_n)

    output = out_p[:T, :B, :H]
    hid = hid_p[:B, :H][None]
    return output, hid


# -------------------- pure-numpy reference (correctness check) --------------------
def _sigmoid(x):
    return 1.0 / (1.0 + np.exp(-x))


def ref_forward(batch_X, lengths, emb_w, w_ih, w_hh, b_ih, b_hh):
    T, B = batch_X.shape
    H = emb_w.shape[1]
    emb = np.asarray(emb_w)[np.asarray(batch_X)]
    h = np.zeros((B, H), np.float32)
    outs = np.zeros((T, B, H), np.float32)
    for t in range(T):
        x = emb[t]
        gi = x @ np.asarray(w_ih).T + np.asarray(b_ih)
        gh = h @ np.asarray(w_hh).T + np.asarray(b_hh)
        r = _sigmoid(gi[:, :H] + gh[:, :H])
        z = _sigmoid(gi[:, H:2 * H] + gh[:, H:2 * H])
        n = np.tanh(gi[:, 2 * H:] + r * gh[:, 2 * H:])
        h_new = (1.0 - z) * n + z * h
        valid = (t < np.asarray(lengths))[:, None]
        outs[t] = np.where(valid, h_new, 0.0)
        h = np.where(valid, h_new, h)
    return outs, h[None]


if __name__ == "__main__":
    # small shapes consistent with the module's forward
    VOCAB, H = 20, 32     # input_size (vocab), hidden_size
    T, B = 8, 4           # max_length, batch_size

    key = jax.random.PRNGKey(0)
    k_emb, k_wi, k_wh, k_bi, k_bh, k_ids = jax.random.split(key, 6)

    emb_w = jax.random.normal(k_emb, (VOCAB, H), jnp.float32)
    emb_w = emb_w.at[PAD].set(0.0)                      # padding_idx=PAD row is zero
    bound = 1.0 / np.sqrt(H)
    w_ih = jax.random.uniform(k_wi, (3 * H, H), jnp.float32, -bound, bound)
    w_hh = jax.random.uniform(k_wh, (3 * H, H), jnp.float32, -bound, bound)
    b_ih = jax.random.uniform(k_bi, (3 * H,), jnp.float32, -bound, bound)
    b_hh = jax.random.uniform(k_bh, (3 * H,), jnp.float32, -bound, bound)

    # padded input batch; lengths sorted descending (pack_padded_sequence requirement)
    input_lengths = np.array([8, 6, 5, 3], dtype=np.int32)
    ids = jax.random.randint(k_ids, (T, B), 1, VOCAB, jnp.int32)
    time_idx = np.arange(T)[:, None]
    batch_X = jnp.where(jnp.asarray(time_idx < input_lengths[None, :]), ids, PAD)

    # f32 path (reference-accurate)
    output, hidden = encoder_forward(batch_X, input_lengths,
                                     emb_w, w_ih, w_hh, b_ih, b_hh)
    jax.block_until_ready((output, hidden))

    ref_out, ref_hid = ref_forward(np.asarray(batch_X), input_lengths,
                                   np.asarray(emb_w), np.asarray(w_ih), np.asarray(w_hh),
                                   np.asarray(b_ih), np.asarray(b_hh))
    np.testing.assert_allclose(np.asarray(output), ref_out, rtol=1e-5, atol=1e-5)
    np.testing.assert_allclose(np.asarray(hidden), ref_hid, rtol=1e-5, atol=1e-5)
    assert output.shape == (T, B, H) and hidden.shape == (1, B, H)

    # bf16 MXU path (v6e/v7x throughput); f32 accumulation -> loose tolerance check
    out_bf, hid_bf = encoder_forward(batch_X, input_lengths,
                                     emb_w, w_ih, w_hh, b_ih, b_hh,
                                     matmul_dtype=jnp.bfloat16)
    jax.block_until_ready((out_bf, hid_bf))
    np.testing.assert_allclose(np.asarray(out_bf), ref_out, rtol=0.1, atol=0.1)
    np.testing.assert_allclose(np.asarray(hid_bf), ref_hid, rtol=0.1, atol=0.1)

    print("KERNEL_OK")
</pallas_src>

<mosaic_0001>
module attributes {stable_mosaic.version = 11 : i64} {
  func.func @gru_encoder_kernel(%arg0: i32, %arg1: memref<8x8x384xf32, #tpu.memory_space<vmem>>, %arg2: memref<8x1xi32, #tpu.memory_space<vmem>>, %arg3: memref<8x128xf32, #tpu.memory_space<vmem>>, %arg4: memref<128x384xf32, #tpu.memory_space<vmem>>, %arg5: memref<1x128xf32, #tpu.memory_space<vmem>>, %arg6: memref<8x8x128xf32, #tpu.memory_space<vmem>>, %arg7: memref<8x128xf32, #tpu.memory_space<vmem>>, %arg8: memref<8x128xf32, #tpu.memory_space<vmem>>) attributes {dimension_semantics = [#tpu.dimension_semantics<arbitrary>], iteration_bounds = array<i64: 1>, scalar_prefetch = 0 : i64, scratch_operands = 1 : i64, tpu.core_type = #tpu.core_type<tc>, window_params = [{transform_indices = @transform_0, window_bounds = array<i64: 8, 8, 384>}, {pipeline_mode = #tpu.pipeline_mode<synchronous>, transform_indices = @transform_1, window_bounds = array<i64: 8, 1>}, {pipeline_mode = #tpu.pipeline_mode<synchronous>, transform_indices = @transform_2, window_bounds = array<i64: 8, 128>}, {pipeline_mode = #tpu.pipeline_mode<synchronous>, transform_indices = @transform_3, window_bounds = array<i64: 128, 384>}, {pipeline_mode = #tpu.pipeline_mode<synchronous>, transform_indices = @transform_4, window_bounds = array<i64: 1, 128>}, {transform_indices = @transform_5, window_bounds = array<i64: 8, 8, 128>}, {pipeline_mode = #tpu.pipeline_mode<synchronous>, transform_indices = @transform_6, window_bounds = array<i64: 8, 128>}]} {
    %c0_i32 = arith.constant 0 : i32
    %0 = arith.cmpi eq, %arg0, %c0_i32 : i32
    %1 = arith.extui %0 : i1 to i32
    %c0_i32_0 = arith.constant 0 : i32
    %2 = arith.cmpi ne, %1, %c0_i32_0 : i32
    scf.if %2 {
      %c0_85 = arith.constant 0 : index
      %c0_86 = arith.constant 0 : index
      %378 = vector.load %arg3[%c0_85, %c0_86] : memref<8x128xf32, #tpu.memory_space<vmem>>, vector<8x128xf32>
      %c0_87 = arith.constant 0 : index
      %c0_88 = arith.constant 0 : index
      %379 = vector.load %arg8[%c0_87, %c0_88] : memref<8x128xf32, #tpu.memory_space<vmem>>, vector<8x128xf32>
      tpu.vector_store %arg8[%c0_87, %c0_88], %378 {strides = array<i32>} : memref<8x128xf32, #tpu.memory_space<vmem>>, vector<8x128xf32>,
    } else {
    }
    %c0 = arith.constant 0 : index
    %c0_1 = arith.constant 0 : index
    %3 = vector.load %arg2[%c0, %c0_1] : memref<8x1xi32, #tpu.memory_space<vmem>>, vector<8x1xi32>
    %c0_2 = arith.constant 0 : index
    %c0_3 = arith.constant 0 : index
    %4 = vector.load %arg4[%c0_2, %c0_3] : memref<128x384xf32, #tpu.memory_space<vmem>>, vector<128x384xf32>
    %c0_4 = arith.constant 0 : index
    %c0_5 = arith.constant 0 : index
    %5 = vector.load %arg5[%c0_4, %c0_5] : memref<1x128xf32, #tpu.memory_space<vmem>>, vector<1x128xf32>
    %c8_i32 = arith.constant 8 : i32
    %6 = arith.muli %arg0, %c8_i32 : i32
    %c0_6 = arith.constant 0 : index
    %c0_7 = arith.constant 0 : index
    %7 = vector.load %arg8[%c0_6, %c0_7] : memref<8x128xf32, #tpu.memory_space<vmem>>, vector<8x128xf32>
    %c0_i32_8 = arith.constant 0 : i32
    %8 = arith.index_cast %c0_i32_8 : i32 to index
    %c0_9 = arith.constant 0 : index
    %c0_10 = arith.constant 0 : index
    %9 = vector.load %arg1[%8, %c0_9, %c0_10] : memref<8x8x384xf32, #tpu.memory_space<vmem>>, vector<1x8x384xf32>
    %10 = vector.shape_cast %9 : vector<1x8x384xf32> to vector<8x384xf32>
    %cst = arith.constant dense<0.000000e+00> : vector<8x384xf32>
    %11 = tpu.matmul %7, %4, %cst {dimension_numbers = #tpu.dot_dimension_numbers<[1], [0], [0], [1], [0, 0, 1, 1], [], []>} : vector<8x128xf32>, vector<128x384xf32>, vector<8x384xf32> -> vector<8x384xf32>
    %12 = vector.extract_strided_slice %10 {offsets = [0, 0], sizes = [8, 128], strides = [1, 1]} : vector<8x384xf32> to vector<8x128xf32>
    %13 = vector.extract_strided_slice %11 {offsets = [0, 0], sizes = [8, 128], strides = [1, 1]} : vector<8x384xf32> to vector<8x128xf32>
    %14 = arith.addf %12, %13 : vector<8x128xf32>
    %15 = arith.negf %14 : vector<8x128xf32>
    %16 = math.exp %15 : vector<8x128xf32>
    %cst_11 = arith.constant 1.000000e+00 : f32
    %17 = vector.broadcast %cst_11 : f32 to vector<8x128xf32>
    %18 = arith.addf %17, %16 : vector<8x128xf32>
    %19 = arith.divf %17, %18 : vector<8x128xf32>
    %20 = vector.extract_strided_slice %10 {offsets = [0, 128], sizes = [8, 128], strides = [1, 1]} : vector<8x384xf32> to vector<8x128xf32>
    %21 = vector.extract_strided_slice %11 {offsets = [0, 128], sizes = [8, 128], strides = [1, 1]} : vector<8x384xf32> to vector<8x128xf32>
    %22 = arith.addf %20, %21 : vector<8x128xf32>
    %23 = arith.negf %22 : vector<8x128xf32>
    %24 = math.exp %23 : vector<8x128xf32>
    %cst_12 = arith.constant 1.000000e+00 : f32
    %25 = vector.broadcast %cst_12 : f32 to vector<8x128xf32>
    %26 = arith.addf %25, %24 : vector<8x128xf32>
    %27 = arith.divf %25, %26 : vector<8x128xf32>
    %28 = vector.extract_strided_slice %10 {offsets = [0, 256], sizes = [8, 128], strides = [1, 1]} : vector<8x384xf32> to vector<8x128xf32>
    %29 = vector.extract_strided_slice %11 {offsets = [0, 256], sizes = [8, 128], strides = [1, 1]} : vector<8x384xf32> to vector<8x128xf32>
    %30 = vector.broadcast %5 : vector<1x128xf32> to vector<8x128xf32>
    %31 = arith.addf %29, %30 : vector<8x128xf32>
    %32 = arith.mulf %19, %31 : vector<8x128xf32>
    %33 = arith.addf %28, %32 : vector<8x128xf32>
    %34 = math.tanh %33 : vector<8x128xf32>
    %cst_13 = arith.constant 1.000000e+00 : f32
    %35 = vector.broadcast %cst_13 : f32 to vector<8x128xf32>
    %36 = arith.subf %35, %27 : vector<8x128xf32>
    %37 = arith.mulf %36, %34 : vector<8x128xf32>
    %38 = arith.mulf %27, %7 : vector<8x128xf32>
    %39 = arith.addf %37, %38 : vector<8x128xf32>
    %40 = arith.addi %6, %c0_i32_8 : i32
    %41 = vector.broadcast %40 : i32 to vector<8x1xi32>
    %42 = arith.cmpi slt, %41, %3 : vector<8x1xi32>
    %cst_14 = arith.constant 0.000000e+00 : f32
    %43 = vector.shape_cast %42 : vector<8x1xi1> to vector<8x1xi1>
    %44 = vector.broadcast %43 : vector<8x1xi1> to vector<8x128xi1>
    %45 = vector.broadcast %cst_14 : f32 to vector<8x128xf32>
    %46 = arith.select %44, %39, %45 : vector<8x128xi1>, vector<8x128xf32>
    %47 = arith.index_cast %c0_i32_8 : i32 to index
    %c0_15 = arith.constant 0 : index
    %c0_16 = arith.constant 0 : index
    %48 = vector.load %arg6[%47, %c0_15, %c0_16] : memref<8x8x128xf32, #tpu.memory_space<vmem>>, vector<1x8x128xf32>
    %49 = vector.shape_cast %48 : vector<1x8x128xf32> to vector<8x128xf32>
    %50 = vector.shape_cast %46 : vector<8x128xf32> to vector<1x8x128xf32>
    tpu.vector_store %arg6[%47, %c0_15, %c0_16], %50 {strides = array<i32>} : memref<8x8x128xf32, #tpu.memory_space<vmem>>, vector<1x8x128xf32>,
    %51 = vector.shape_cast %42 : vector<8x1xi1> to vector<8x1xi1>
    %52 = vector.broadcast %51 : vector<8x1xi1> to vector<8x128xi1>
    %53 = arith.select %52, %39, %7 : vector<8x128xi1>, vector<8x128xf32>
    %c1_i32 = arith.constant 1 : i32
    %54 = arith.index_cast %c1_i32 : i32 to index
    %c0_17 = arith.constant 0 : index
    %c0_18 = arith.constant 0 : index
    %55 = vector.load %arg1[%54, %c0_17, %c0_18] : memref<8x8x384xf32, #tpu.memory_space<vmem>>, vector<1x8x384xf32>
    %56 = vector.shape_cast %55 : vector<1x8x384xf32> to vector<8x384xf32>
    %cst_19 = arith.constant dense<0.000000e+00> : vector<8x384xf32>
    %57 = tpu.matmul %53, %4, %cst_19 {dimension_numbers = #tpu.dot_dimension_numbers<[1], [0], [0], [1], [0, 0, 1, 1], [], []>} : vector<8x128xf32>, vector<128x384xf32>, vector<8x384xf32> -> vector<8x384xf32>
    %58 = vector.extract_strided_slice %56 {offsets = [0, 0], sizes = [8, 128], strides = [1, 1]} : vector<8x384xf32> to vector<8x128xf32>
    %59 = vector.extract_strided_slice %57 {offsets = [0, 0], sizes = [8, 128], strides = [1, 1]} : vector<8x384xf32> to vector<8x128xf32>
    %60 = arith.addf %58, %59 : vector<8x128xf32>
    %61 = arith.negf %60 : vector<8x128xf32>
    %62 = math.exp %61 : vector<8x128xf32>
    %cst_20 = arith.constant 1.000000e+00 : f32
    %63 = vector.broadcast %cst_20 : f32 to vector<8x128xf32>
    %64 = arith.addf %63, %62 : vector<8x128xf32>
    %65 = arith.divf %63, %64 : vector<8x128xf32>
    %66 = vector.extract_strided_slice %56 {offsets = [0, 128], sizes = [8, 128], strides = [1, 1]} : vector<8x384xf32> to vector<8x128xf32>
    %67 = vector.extract_strided_slice %57 {offsets = [0, 128], sizes = [8, 128], strides = [1, 1]} : vector<8x384xf32> to vector<8x128xf32>
    %68 = arith.addf %66, %67 : vector<8x128xf32>
    %69 = arith.negf %68 : vector<8x128xf32>
    %70 = math.exp %69 : vector<8x128xf32>
    %cst_21 = arith.constant 1.000000e+00 : f32
    %71 = vector.broadcast %cst_21 : f32 to vector<8x128xf32>
    %72 = arith.addf %71, %70 : vector<8x128xf32>
    %73 = arith.divf %71, %72 : vector<8x128xf32>
    %74 = vector.extract_strided_slice %56 {offsets = [0, 256], sizes = [8, 128], strides = [1, 1]} : vector<8x384xf32> to vector<8x128xf32>
    %75 = vector.extract_strided_slice %57 {offsets = [0, 256], sizes = [8, 128], strides = [1, 1]} : vector<8x384xf32> to vector<8x128xf32>
    %76 = vector.broadcast %5 : vector<1x128xf32> to vector<8x128xf32>
    %77 = arith.addf %75, %76 : vector<8x128xf32>
    %78 = arith.mulf %65, %77 : vector<8x128xf32>
    %79 = arith.addf %74, %78 : vector<8x128xf32>
    %80 = math.tanh %79 : vector<8x128xf32>
    %cst_22 = arith.constant 1.000000e+00 : f32
    %81 = vector.broadcast %cst_22 : f32 to vector<8x128xf32>
    %82 = arith.subf %81, %73 : vector<8x128xf32>
    %83 = arith.mulf %82, %80 : vector<8x128xf32>
    %84 = arith.mulf %73, %53 : vector<8x128xf32>
    %85 = arith.addf %83, %84 : vector<8x128xf32>
    %86 = arith.addi %6, %c1_i32 : i32
    %87 = vector.broadcast %86 : i32 to vector<8x1xi32>
    %88 = arith.cmpi slt, %87, %3 : vector<8x1xi32>
    %cst_23 = arith.constant 0.000000e+00 : f32
    %89 = vector.shape_cast %88 : vector<8x1xi1> to vector<8x1xi1>
    %90 = vector.broadcast %89 : vector<8x1xi1> to vector<8x128xi1>
    %91 = vector.broadcast %cst_23 : f32 to vector<8x128xf32>
    %92 = arith.select %90, %85, %91 : vector<8x128xi1>, vector<8x128xf32>
    %93 = arith.index_cast %c1_i32 : i32 to index
    %c0_24 = arith.constant 0 : index
    %c0_25 = arith.constant 0 : index
    %94 = vector.load %arg6[%93, %c0_24, %c0_25] : memref<8x8x128xf32, #tpu.memory_space<vmem>>, vector<1x8x128xf32>
    %95 = vector.shape_cast %94 : vector<1x8x128xf32> to vector<8x128xf32>
    %96 = vector.shape_cast %92 : vector<8x128xf32> to vector<1x8x128xf32>
    tpu.vector_store %arg6[%93, %c0_24, %c0_25], %96 {strides = array<i32>} : memref<8x8x128xf32, #tpu.memory_space<vmem>>, vector<1x8x128xf32>,
    %97 = vector.shape_cast %88 : vector<8x1xi1> to vector<8x1xi1>
    %98 = vector.broadcast %97 : vector<8x1xi1> to vector<8x128xi1>
    %99 = arith.select %98, %85, %53 : vector<8x128xi1>, vector<8x128xf32>
    %c2_i32 = arith.constant 2 : i32
    %100 = arith.index_cast %c2_i32 : i32 to index
    %c0_26 = arith.constant 0 : index
    %c0_27 = arith.constant 0 : index
    %101 = vector.load %arg1[%100, %c0_26, %c0_27] : memref<8x8x384xf32, #tpu.memory_space<vmem>>, vector<1x8x384xf32>
    %102 = vector.shape_cast %101 : vector<1x8x384xf32> to vector<8x384xf32>
    %cst_28 = arith.constant dense<0.000000e+00> : vector<8x384xf32>
    %103 = tpu.matmul %99, %4, %cst_28 {dimension_numbers = #tpu.dot_dimension_numbers<[1], [0], [0], [1], [0, 0, 1, 1], [], []>} : vector<8x128xf32>, vector<128x384xf32>, vector<8x384xf32> -> vector<8x384xf32>
    %104 = vector.extract_strided_slice %102 {offsets = [0, 0], sizes = [8, 128], strides = [1, 1]} : vector<8x384xf32> to vector<8x128xf32>
    %105 = vector.extract_strided_slice %103 {offsets = [0, 0], sizes = [8, 128], strides = [1, 1]} : vector<8x384xf32> to vector<8x128xf32>
    %106 = arith.addf %104, %105 : vector<8x128xf32>
    %107 = arith.negf %106 : vector<8x128xf32>
    %108 = math.exp %107 : vector<8x128xf32>
    %cst_29 = arith.constant 1.000000e+00 : f32
    %109 = vector.broadcast %cst_29 : f32 to vector<8x128xf32>
    %110 = arith.addf %109, %108 : vector<8x128xf32>
    %111 = arith.divf %109, %110 : vector<8x128xf32>
    %112 = vector.extract_strided_slice %102 {offsets = [0, 128], sizes = [8, 128], strides = [1, 1]} : vector<8x384xf32> to vector<8x128xf32>
    %113 = vector.extract_strided_slice %103 {offsets = [0, 128], sizes = [8, 128], strides = [1, 1]} : vector<8x384xf32> to vector<8x128xf32>
    %114 = arith.addf %112, %113 : vector<8x128xf32>
    %115 = arith.negf %114 : vector<8x128xf32>
    %116 = math.exp %115 : vector<8x128xf32>
    %cst_30 = arith.constant 1.000000e+00 : f32
    %117 = vector.broadcast %cst_30 : f32 to vector<8x128xf32>
    %118 = arith.addf %117, %116 : vector<8x128xf32>
    %119 = arith.divf %117, %118 : vector<8x128xf32>
    %120 = vector.extract_strided_slice %102 {offsets = [0, 256], sizes = [8, 128], strides = [1, 1]} : vector<8x384xf32> to vector<8x128xf32>
    %121 = vector.extract_strided_slice %103 {offsets = [0, 256], sizes = [8, 128], strides = [1, 1]} : vector<8x384xf32> to vector<8x128xf32>
    %122 = vector.broadcast %5 : vector<1x128xf32> to vector<8x128xf32>
    %123 = arith.addf %121, %122 : vector<8x128xf32>
    %124 = arith.mulf %111, %123 : vector<8x128xf32>
    %125 = arith.addf %120, %124 : vector<8x128xf32>
    %126 = math.tanh %125 : vector<8x128xf32>
    %cst_31 = arith.constant 1.000000e+00 : f32
    %127 = vector.broadcast %cst_31 : f32 to vector<8x128xf32>
    %128 = arith.subf %127, %119 : vector<8x128xf32>
    %129 = arith.mulf %128, %126 : vector<8x128xf32>
    %130 = arith.mulf %119, %99 : vector<8x128xf32>
    %131 = arith.addf %129, %130 : vector<8x128xf32>
    %132 = arith.addi %6, %c2_i32 : i32
    %133 = vector.broadcast %132 : i32 to vector<8x1xi32>
    %134 = arith.cmpi slt, %133, %3 : vector<8x1xi32>
    %cst_32 = arith.constant 0.000000e+00 : f32
    %135 = vector.shape_cast %134 : vector<8x1xi1> to vector<8x1xi1>
    %136 = vector.broadcast %135 : vector<8x1xi1> to vector<8x128xi1>
    %137 = vector.broadcast %cst_32 : f32 to vector<8x128xf32>
    %138 = arith.select %136, %131, %137 : vector<8x128xi1>, vector<8x128xf32>
    %139 = arith.index_cast %c2_i32 : i32 to index
    %c0_33 = arith.constant 0 : index
    %c0_34 = arith.constant 0 : index
    %140 = vector.load %arg6[%139, %c0_33, %c0_34] : memref<8x8x128xf32, #tpu.memory_space<vmem>>, vector<1x8x128xf32>
    %141 = vector.shape_cast %140 : vector<1x8x128xf32> to vector<8x128xf32>
    %142 = vector.shape_cast %138 : vector<8x128xf32> to vector<1x8x128xf32>
    tpu.vector_store %arg6[%139, %c0_33, %c0_34], %142 {strides = array<i32>} : memref<8x8x128xf32, #tpu.memory_space<vmem>>, vector<1x8x128xf32>,
    %143 = vector.shape_cast %134 : vector<8x1xi1> to vector<8x1xi1>
    %144 = vector.broadcast %143 : vector<8x1xi1> to vector<8x128xi1>
    %145 = arith.select %144, %131, %99 : vector<8x128xi1>, vector<8x128xf32>
    %c3_i32 = arith.constant 3 : i32
    %146 = arith.index_cast %c3_i32 : i32 to index
    %c0_35 = arith.constant 0 : index
    %c0_36 = arith.constant 0 : index
    %147 = vector.load %arg1[%146, %c0_35, %c0_36] : memref<8x8x384xf32, #tpu.memory_space<vmem>>, vector<1x8x384xf32>
    %148 = vector.shape_cast %147 : vector<1x8x384xf32> to vector<8x384xf32>
    %cst_37 = arith.constant dense<0.000000e+00> : vector<8x384xf32>
    %149 = tpu.matmul %145, %4, %cst_37 {dimension_numbers = #tpu.dot_dimension_numbers<[1], [0], [0], [1], [0, 0, 1, 1], [], []>} : vector<8x128xf32>, vector<128x384xf32>, vector<8x384xf32> -> vector<8x384xf32>
    %150 = vector.extract_strided_slice %148 {offsets = [0, 0], sizes = [8, 128], strides = [1, 1]} : vector<8x384xf32> to vector<8x128xf32>
    %151 = vector.extract_strided_slice %149 {offsets = [0, 0], sizes = [8, 128], strides = [1, 1]} : vector<8x384xf32> to vector<8x128xf32>
    %152 = arith.addf %150, %151 : vector<8x128xf32>
    %153 = arith.negf %152 : vector<8x128xf32>
    %154 = math.exp %153 : vector<8x128xf32>
    %cst_38 = arith.constant 1.000000e+00 : f32
    %155 = vector.broadcast %cst_38 : f32 to vector<8x128xf32>
    %156 = arith.addf %155, %154 : vector<8x128xf32>
    %157 = arith.divf %155, %156 : vector<8x128xf32>
    %158 = vector.extract_strided_slice %148 {offsets = [0, 128], sizes = [8, 128], strides = [1, 1]} : vector<8x384xf32> to vector<8x128xf32>
    %159 = vector.extract_strided_slice %149 {offsets = [0, 128], sizes = [8, 128], strides = [1, 1]} : vector<8x384xf32> to vector<8x128xf32>
    %160 = arith.addf %158, %159 : vector<8x128xf32>
    %161 = arith.negf %160 : vector<8x128xf32>
    %162 = math.exp %161 : vector<8x128xf32>
    %cst_39 = arith.constant 1.000000e+00 : f32
    %163 = vector.broadcast %cst_39 : f32 to vector<8x128xf32>
    %164 = arith.addf %163, %162 : vector<8x128xf32>
    %165 = arith.divf %163, %164 : vector<8x128xf32>
    %166 = vector.extract_strided_slice %148 {offsets = [0, 256], sizes = [8, 128], strides = [1, 1]} : vector<8x384xf32> to vector<8x128xf32>
    %167 = vector.extract_strided_slice %149 {offsets = [0, 256], sizes = [8, 128], strides = [1, 1]} : vector<8x384xf32> to vector<8x128xf32>
    %168 = vector.broadcast %5 : vector<1x128xf32> to vector<8x128xf32>
    %169 = arith.addf %167, %168 : vector<8x128xf32>
    %170 = arith.mulf %157, %169 : vector<8x128xf32>
    %171 = arith.addf %166, %170 : vector<8x128xf32>
    %172 = math.tanh %171 : vector<8x128xf32>
    %cst_40 = arith.constant 1.000000e+00 : f32
    %173 = vector.broadcast %cst_40 : f32 to vector<8x128xf32>
    %174 = arith.subf %173, %165 : vector<8x128xf32>
    %175 = arith.mulf %174, %172 : vector<8x128xf32>
    %176 = arith.mulf %165, %145 : vector<8x128xf32>
    %177 = arith.addf %175, %176 : vector<8x128xf32>
    %178 = arith.addi %6, %c3_i32 : i32
    %179 = vector.broadcast %178 : i32 to vector<8x1xi32>
    %180 = arith.cmpi slt, %179, %3 : vector<8x1xi32>
    %cst_41 = arith.constant 0.000000e+00 : f32
    %181 = vector.shape_cast %180 : vector<8x1xi1> to vector<8x1xi1>
    %182 = vector.broadcast %181 : vector<8x1xi1> to vector<8x128xi1>
    %183 = vector.broadcast %cst_41 : f32 to vector<8x128xf32>
    %184 = arith.select %182, %177, %183 : vector<8x128xi1>, vector<8x128xf32>
    %185 = arith.index_cast %c3_i32 : i32 to index
    %c0_42 = arith.constant 0 : index
    %c0_43 = arith.constant 0 : index
    %186 = vector.load %arg6[%185, %c0_42, %c0_43] : memref<8x8x128xf32, #tpu.memory_space<vmem>>, vector<1x8x128xf32>
    %187 = vector.shape_cast %186 : vector<1x8x128xf32> to vector<8x128xf32>
    %188 = vector.shape_cast %184 : vector<8x128xf32> to vector<1x8x128xf32>
    tpu.vector_store %arg6[%185, %c0_42, %c0_43], %188 {strides = array<i32>} : memref<8x8x128xf32, #tpu.memory_space<vmem>>, vector<1x8x128xf32>,
    %189 = vector.shape_cast %180 : vector<8x1xi1> to vector<8x1xi1>
    %190 = vector.broadcast %189 : vector<8x1xi1> to vector<8x128xi1>
    %191 = arith.select %190, %177, %145 : vector<8x128xi1>, vector<8x128xf32>
    %c4_i32 = arith.constant 4 : i32
    %192 = arith.index_cast %c4_i32 : i32 to index
    %c0_44 = arith.constant 0 : index
    %c0_45 = arith.constant 0 : index
    %193 = vector.load %arg1[%192, %c0_44, %c0_45] : memref<8x8x384xf32, #tpu.memory_space<vmem>>, vector<1x8x384xf32>
    %194 = vector.shape_cast %193 : vector<1x8x384xf32> to vector<8x384xf32>
    %cst_46 = arith.constant dense<0.000000e+00> : vector<8x384xf32>
    %195 = tpu.matmul %191, %4, %cst_46 {dimension_numbers = #tpu.dot_dimension_numbers<[1], [0], [0], [1], [0, 0, 1, 1], [], []>} : vector<8x128xf32>, vector<128x384xf32>, vector<8x384xf32> -> vector<8x384xf32>
    %196 = vector.extract_strided_slice %194 {offsets = [0, 0], sizes = [8, 128], strides = [1, 1]} : vector<8x384xf32> to vector<8x128xf32>
    %197 = vector.extract_strided_slice %195 {offsets = [0, 0], sizes = [8, 128], strides = [1, 1]} : vector<8x384xf32> to vector<8x128xf32>
    %198 = arith.addf %196, %197 : vector<8x128xf32>
    %199 = arith.negf %198 : vector<8x128xf32>
    %200 = math.exp %199 : vector<8x128xf32>
    %cst_47 = arith.constant 1.000000e+00 : f32
    %201 = vector.broadcast %cst_47 : f32 to vector<8x128xf32>
    %202 = arith.addf %201, %200 : vector<8x128xf32>
    %203 = arith.divf %201, %202 : vector<8x128xf32>
    %204 = vector.extract_strided_slice %194 {offsets = [0, 128], sizes = [8, 128], strides = [1, 1]} : vector<8x384xf32> to vector<8x128xf32>
    %205 = vector.extract_strided_slice %195 {offsets = [0, 128], sizes = [8, 128], strides = [1, 1]} : vector<8x384xf32> to vector<8x128xf32>
    %206 = arith.addf %204, %205 : vector<8x128xf32>
    %207 = arith.negf %206 : vector<8x128xf32>
    %208 = math.exp %207 : vector<8x128xf32>
    %cst_48 = arith.constant 1.000000e+00 : f32
    %209 = vector.broadcast %cst_48 : f32 to vector<8x128xf32>
    %210 = arith.addf %209, %208 : vector<8x128xf32>
    %211 = arith.divf %209, %210 : vector<8x128xf32>
    %212 = vector.extract_strided_slice %194 {offsets = [0, 256], sizes = [8, 128], strides = [1, 1]} : vector<8x384xf32> to vector<8x128xf32>
    %213 = vector.extract_strided_slice %195 {offsets = [0, 256], sizes = [8, 128], strides = [1, 1]} : vector<8x384xf32> to vector<8x128xf32>
    %214 = vector.broadcast %5 : vector<1x128xf32> to vector<8x128xf32>
    %215 = arith.addf %213, %214 : vector<8x128xf32>
    %216 = arith.mulf %203, %215 : vector<8x128xf32>
    %217 = arith.addf %212, %216 : vector<8x128xf32>
    %218 = math.tanh %217 : vector<8x128xf32>
    %cst_49 = arith.constant 1.000000e+00 : f32
    %219 = vector.broadcast %cst_49 : f32 to vector<8x128xf32>
    %220 = arith.subf %219, %211 : vector<8x128xf32>
    %221 = arith.mulf %220, %218 : vector<8x128xf32>
    %222 = arith.mulf %211, %191 : vector<8x128xf32>
    %223 = arith.addf %221, %222 : vector<8x128xf32>
    %224 = arith.addi %6, %c4_i32 : i32
    %225 = vector.broadcast %224 : i32 to vector<8x1xi32>
    %226 = arith.cmpi slt, %225, %3 : vector<8x1xi32>
    %cst_50 = arith.constant 0.000000e+00 : f32
    %227 = vector.shape_cast %226 : vector<8x1xi1> to vector<8x1xi1>
    %228 = vector.broadcast %227 : vector<8x1xi1> to vector<8x128xi1>
    %229 = vector.broadcast %cst_50 : f32 to vector<8x128xf32>
    %230 = arith.select %228, %223, %229 : vector<8x128xi1>, vector<8x128xf32>
    %231 = arith.index_cast %c4_i32 : i32 to index
    %c0_51 = arith.constant 0 : index
    %c0_52 = arith.constant 0 : index
    %232 = vector.load %arg6[%231, %c0_51, %c0_52] : memref<8x8x128xf32, #tpu.memory_space<vmem>>, vector<1x8x128xf32>
    %233 = vector.shape_cast %232 : vector<1x8x128xf32> to vector<8x128xf32>
    %234 = vector.shape_cast %230 : vector<8x128xf32> to vector<1x8x128xf32>
    tpu.vector_store %arg6[%231, %c0_51, %c0_52], %234 {strides = array<i32>} : memref<8x8x128xf32, #tpu.memory_space<vmem>>, vector<1x8x128xf32>,
    %235 = vector.shape_cast %226 : vector<8x1xi1> to vector<8x1xi1>
    %236 = vector.broadcast %235 : vector<8x1xi1> to vector<8x128xi1>
    %237 = arith.select %236, %223, %191 : vector<8x128xi1>, vector<8x128xf32>
    %c5_i32 = arith.constant 5 : i32
    %238 = arith.index_cast %c5_i32 : i32 to index
    %c0_53 = arith.constant 0 : index
    %c0_54 = arith.constant 0 : index
    %239 = vector.load %arg1[%238, %c0_53, %c0_54] : memref<8x8x384xf32, #tpu.memory_space<vmem>>, vector<1x8x384xf32>
    %240 = vector.shape_cast %239 : vector<1x8x384xf32> to vector<8x384xf32>
    %cst_55 = arith.constant dense<0.000000e+00> : vector<8x384xf32>
    %241 = tpu.matmul %237, %4, %cst_55 {dimension_numbers = #tpu.dot_dimension_numbers<[1], [0], [0], [1], [0, 0, 1, 1], [], []>} : vector<8x128xf32>, vector<128x384xf32>, vector<8x384xf32> -> vector<8x384xf32>
    %242 = vector.extract_strided_slice %240 {offsets = [0, 0], sizes = [8, 128], strides = [1, 1]} : vector<8x384xf32> to vector<8x128xf32>
    %243 = vector.extract_strided_slice %241 {offsets = [0, 0], sizes = [8, 128], strides = [1, 1]} : vector<8x384xf32> to vector<8x128xf32>
    %244 = arith.addf %242, %243 : vector<8x128xf32>
    %245 = arith.negf %244 : vector<8x128xf32>
    %246 = math.exp %245 : vector<8x128xf32>
    %cst_56 = arith.constant 1.000000e+00 : f32
    %247 = vector.broadcast %cst_56 : f32 to vector<8x128xf32>
    %248 = arith.addf %247, %246 : vector<8x128xf32>
    %249 = arith.divf %247, %248 : vector<8x128xf32>
    %250 = vector.extract_strided_slice %240 {offsets = [0, 128], sizes = [8, 128], strides = [1, 1]} : vector<8x384xf32> to vector<8x128xf32>
    %251 = vector.extract_strided_slice %241 {offsets = [0, 128], sizes = [8, 128], strides = [1, 1]} : vector<8x384xf32> to vector<8x128xf32>
    %252 = arith.addf %250, %251 : vector<8x128xf32>
    %253 = arith.negf %252 : vector<8x128xf32>
    %254 = math.exp %253 : vector<8x128xf32>
    %cst_57 = arith.constant 1.000000e+00 : f32
    %255 = vector.broadcast %cst_57 : f32 to vector<8x128xf32>
    %256 = arith.addf %255, %254 : vector<8x128xf32>
    %257 = arith.divf %255, %256 : vector<8x128xf32>
    %258 = vector.extract_strided_slice %240 {offsets = [0, 256], sizes = [8, 128], strides = [1, 1]} : vector<8x384xf32> to vector<8x128xf32>
    %259 = vector.extract_strided_slice %241 {offsets = [0, 256], sizes = [8, 128], strides = [1, 1]} : vector<8x384xf32> to vector<8x128xf32>
    %260 = vector.broadcast %5 : vector<1x128xf32> to vector<8x128xf32>
    %261 = arith.addf %259, %260 : vector<8x128xf32>
    %262 = arith.mulf %249, %261 : vector<8x128xf32>
    %263 = arith.addf %258, %262 : vector<8x128xf32>
    %264 = math.tanh %263 : vector<8x128xf32>
    %cst_58 = arith.constant 1.000000e+00 : f32
    %265 = vector.broadcast %cst_58 : f32 to vector<8x128xf32>
    %266 = arith.subf %265, %257 : vector<8x128xf32>
    %267 = arith.mulf %266, %264 : vector<8x128xf32>
    %268 = arith.mulf %257, %237 : vector<8x128xf32>
    %269 = arith.addf %267, %268 : vector<8x128xf32>
    %270 = arith.addi %6, %c5_i32 : i32
    %271 = vector.broadcast %270 : i32 to vector<8x1xi32>
    %272 = arith.cmpi slt, %271, %3 : vector<8x1xi32>
    %cst_59 = arith.constant 0.000000e+00 : f32
    %273 = vector.shape_cast %272 : vector<8x1xi1> to vector<8x1xi1>
    %274 = vector.broadcast %273 : vector<8x1xi1> to vector<8x128xi1>
    %275 = vector.broadcast %cst_59 : f32 to vector<8x128xf32>
    %276 = arith.select %274, %269, %275 : vector<8x128xi1>, vector<8x128xf32>
    %277 = arith.index_cast %c5_i32 : i32 to index
    %c0_60 = arith.constant 0 : index
    %c0_61 = arith.constant 0 : index
    %278 = vector.load %arg6[%277, %c0_60, %c0_61] : memref<8x8x128xf32, #tpu.memory_space<vmem>>, vector<1x8x128xf32>
    %279 = vector.shape_cast %278 : vector<1x8x128xf32> to vector<8x128xf32>
    %280 = vector.shape_cast %276 : vector<8x128xf32> to vector<1x8x128xf32>
    tpu.vector_store %arg6[%277, %c0_60, %c0_61], %280 {strides = array<i32>} : memref<8x8x128xf32, #tpu.memory_space<vmem>>, vector<1x8x128xf32>,
    %281 = vector.shape_cast %272 : vector<8x1xi1> to vector<8x1xi1>
    %282 = vector.broadcast %281 : vector<8x1xi1> to vector<8x128xi1>
    %283 = arith.select %282, %269, %237 : vector<8x128xi1>, vector<8x128xf32>
    %c6_i32 = arith.constant 6 : i32
    %284 = arith.index_cast %c6_i32 : i32 to index
    %c0_62 = arith.constant 0 : index
    %c0_63 = arith.constant 0 : index
    %285 = vector.load %arg1[%284, %c0_62, %c0_63] : memref<8x8x384xf32, #tpu.memory_space<vmem>>, vector<1x8x384xf32>
    %286 = vector.shape_cast %285 : vector<1x8x384xf32> to vector<8x384xf32>
    %cst_64 = arith.constant dense<0.000000e+00> : vector<8x384xf32>
    %287 = tpu.matmul %283, %4, %cst_64 {dimension_numbers = #tpu.dot_dimension_numbers<[1], [0], [0], [1], [0, 0, 1, 1], [], []>} : vector<8x128xf32>, vector<128x384xf32>, vector<8x384xf32> -> vector<8x384xf32>
    %288 = vector.extract_strided_slice %286 {offsets = [0, 0], sizes = [8, 128], strides = [1, 1]} : vector<8x384xf32> to vector<8x128xf32>
    %289 = vector.extract_strided_slice %287 {offsets = [0, 0], sizes = [8, 128], strides = [1, 1]} : vector<8x384xf32> to vector<8x128xf32>
    %290 = arith.addf %288, %289 : vector<8x128xf32>
    %291 = arith.negf %290 : vector<8x128xf32>
    %292 = math.exp %291 : vector<8x128xf32>
    %cst_65 = arith.constant 1.000000e+00 : f32
    %293 = vector.broadcast %cst_65 : f32 to vector<8x128xf32>
    %294 = arith.addf %293, %292 : vector<8x128xf32>
    %295 = arith.divf %293, %294 : vector<8x128xf32>
    %296 = vector.extract_strided_slice %286 {offsets = [0, 128], sizes = [8, 128], strides = [1, 1]} : vector<8x384xf32> to vector<8x128xf32>
    %297 = vector.extract_strided_slice %287 {offsets = [0, 128], sizes = [8, 128], strides = [1, 1]} : vector<8x384xf32> to vector<8x128xf32>
    %298 = arith.addf %296, %297 : vector<8x128xf32>
    %299 = arith.negf %298 : vector<8x128xf32>
    %300 = math.exp %299 : vector<8x128xf32>
    %cst_66 = arith.constant 1.000000e+00 : f32
    %301 = vector.broadcast %cst_66 : f32 to vector<8x128xf32>
    %302 = arith.addf %301, %300 : vector<8x128xf32>
    %303 = arith.divf %301, %302 : vector<8x128xf32>
    %304 = vector.extract_strided_slice %286 {offsets = [0, 256], sizes = [8, 128], strides = [1, 1]} : vector<8x384xf32> to vector<8x128xf32>
    %305 = vector.extract_strided_slice %287 {offsets = [0, 256], sizes = [8, 128], strides = [1, 1]} : vector<8x384xf32> to vector<8x128xf32>
    %306 = vector.broadcast %5 : vector<1x128xf32> to vector<8x128xf32>
    %307 = arith.addf %305, %306 : vector<8x128xf32>
    %308 = arith.mulf %295, %307 : vector<8x128xf32>
    %309 = arith.addf %304, %308 : vector<8x128xf32>
    %310 = math.tanh %309 : vector<8x128xf32>
    %cst_67 = arith.constant 1.000000e+00 : f32
    %311 = vector.broadcast %cst_67 : f32 to vector<8x128xf32>
    %312 = arith.subf %311, %303 : vector<8x128xf32>
    %313 = arith.mulf %312, %310 : vector<8x128xf32>
    %314 = arith.mulf %303, %283 : vector<8x128xf32>
    %315 = arith.addf %313, %314 : vector<8x128xf32>
    %316 = arith.addi %6, %c6_i32 : i32
    %317 = vector.broadcast %316 : i32 to vector<8x1xi32>
    %318 = arith.cmpi slt, %317, %3 : vector<8x1xi32>
    %cst_68 = arith.constant 0.000000e+00 : f32
    %319 = vector.shape_cast %318 : vector<8x1xi1> to vector<8x1xi1>
    %320 = vector.broadcast %319 : vector<8x1xi1> to vector<8x128xi1>
    %321 = vector.broadcast %cst_68 : f32 to vector<8x128xf32>
    %322 = arith.select %320, %315, %321 : vector<8x128xi1>, vector<8x128xf32>
    %323 = arith.index_cast %c6_i32 : i32 to index
    %c0_69 = arith.constant 0 : index
    %c0_70 = arith.constant 0 : index
    %324 = vector.load %arg6[%323, %c0_69, %c0_70] : memref<8x8x128xf32, #tpu.memory_space<vmem>>, vector<1x8x128xf32>
    %325 = vector.shape_cast %324 : vector<1x8x128xf32> to vector<8x128xf32>
    %326 = vector.shape_cast %322 : vector<8x128xf32> to vector<1x8x128xf32>
    tpu.vector_store %arg6[%323, %c0_69, %c0_70], %326 {strides = array<i32>} : memref<8x8x128xf32, #tpu.memory_space<vmem>>, vector<1x8x128xf32>,
    %327 = vector.shape_cast %318 : vector<8x1xi1> to vector<8x1xi1>
    %328 = vector.broadcast %327 : vector<8x1xi1> to vector<8x128xi1>
    %329 = arith.select %328, %315, %283 : vector<8x128xi1>, vector<8x128xf32>
    %c7_i32 = arith.constant 7 : i32
    %330 = arith.index_cast %c7_i32 : i32 to index
    %c0_71 = arith.constant 0 : index
    %c0_72 = arith.constant 0 : index
    %331 = vector.load %arg1[%330, %c0_71, %c0_72] : memref<8x8x384xf32, #tpu.memory_space<vmem>>, vector<1x8x384xf32>
    %332 = vector.shape_cast %331 : vector<1x8x384xf32> to vector<8x384xf32>
    %cst_73 = arith.constant dense<0.000000e+00> : vector<8x384xf32>
    %333 = tpu.matmul %329, %4, %cst_73 {dimension_numbers = #tpu.dot_dimension_numbers<[1], [0], [0], [1], [0, 0, 1, 1], [], []>} : vector<8x128xf32>, vector<128x384xf32>, vector<8x384xf32> -> vector<8x384xf32>
    %334 = vector.extract_strided_slice %332 {offsets = [0, 0], sizes = [8, 128], strides = [1, 1]} : vector<8x384xf32> to vector<8x128xf32>
    %335 = vector.extract_strided_slice %333 {offsets = [0, 0], sizes = [8, 128], strides = [1, 1]} : vector<8x384xf32> to vector<8x128xf32>
    %336 = arith.addf %334, %335 : vector<8x128xf32>
    %337 = arith.negf %336 : vector<8x128xf32>
    %338 = math.exp %337 : vector<8x128xf32>
    %cst_74 = arith.constant 1.000000e+00 : f32
    %339 = vector.broadcast %cst_74 : f32 to vector<8x128xf32>
    %340 = arith.addf %339, %338 : vector<8x128xf32>
    %341 = arith.divf %339, %340 : vector<8x128xf32>
    %342 = vector.extract_strided_slice %332 {offsets = [0, 128], sizes = [8, 128], strides = [1, 1]} : vector<8x384xf32> to vector<8x128xf32>
    %343 = vector.extract_strided_slice %333 {offsets = [0, 128], sizes = [8, 128], strides = [1, 1]} : vector<8x384xf32> to vector<8x128xf32>
    %344 = arith.addf %342, %343 : vector<8x128xf32>
    %345 = arith.negf %344 : vector<8x128xf32>
    %346 = math.exp %345 : vector<8x128xf32>
    %cst_75 = arith.constant 1.000000e+00 : f32
    %347 = vector.broadcast %cst_75 : f32 to vector<8x128xf32>
    %348 = arith.addf %347, %346 : vector<8x128xf32>
    %349 = arith.divf %347, %348 : vector<8x128xf32>
    %350 = vector.extract_strided_slice %332 {offsets = [0, 256], sizes = [8, 128], strides = [1, 1]} : vector<8x384xf32> to vector<8x128xf32>
    %351 = vector.extract_strided_slice %333 {offsets = [0, 256], sizes = [8, 128], strides = [1, 1]} : vector<8x384xf32> to vector<8x128xf32>
    %352 = vector.broadcast %5 : vector<1x128xf32> to vector<8x128xf32>
    %353 = arith.addf %351, %352 : vector<8x128xf32>
    %354 = arith.mulf %341, %353 : vector<8x128xf32>
    %355 = arith.addf %350, %354 : vector<8x128xf32>
    %356 = math.tanh %355 : vector<8x128xf32>
    %cst_76 = arith.constant 1.000000e+00 : f32
    %357 = vector.broadcast %cst_76 : f32 to vector<8x128xf32>
    %358 = arith.subf %357, %349 : vector<8x128xf32>
    %359 = arith.mulf %358, %356 : vector<8x128xf32>
    %360 = arith.mulf %349, %329 : vector<8x128xf32>
    %361 = arith.addf %359, %360 : vector<8x128xf32>
    %362 = arith.addi %6, %c7_i32 : i32
    %363 = vector.broadcast %362 : i32 to vector<8x1xi32>
    %364 = arith.cmpi slt, %363, %3 : vector<8x1xi32>
    %cst_77 = arith.constant 0.000000e+00 : f32
    %365 = vector.shape_cast %364 : vector<8x1xi1> to vector<8x1xi1>
    %366 = vector.broadcast %365 : vector<8x1xi1> to vector<8x128xi1>
    %367 = vector.broadcast %cst_77 : f32 to vector<8x128xf32>
    %368 = arith.select %366, %361, %367 : vector<8x128xi1>, vector<8x128xf32>
    %369 = arith.index_cast %c7_i32 : i32 to index
    %c0_78 = arith.constant 0 : index
    %c0_79 = arith.constant 0 : index
    %370 = vector.load %arg6[%369, %c0_78, %c0_79] : memref<8x8x128xf32, #tpu.memory_space<vmem>>, vector<1x8x128xf32>
    %371 = vector.shape_cast %370 : vector<1x8x128xf32> to vector<8x128xf32>
    %372 = vector.shape_cast %368 : vector<8x128xf32> to vector<1x8x128xf32>
    tpu.vector_store %arg6[%369, %c0_78, %c0_79], %372 {strides = array<i32>} : memref<8x8x128xf32, #tpu.memory_space<vmem>>, vector<1x8x128xf32>,
    %373 = vector.shape_cast %364 : vector<8x1xi1> to vector<8x1xi1>
    %374 = vector.broadcast %373 : vector<8x1xi1> to vector<8x128xi1>
    %375 = arith.select %374, %361, %329 : vector<8x128xi1>, vector<8x128xf32>
    %c8_i32_80 = arith.constant 8 : i32
    %c0_81 = arith.constant 0 : index
    %c0_82 = arith.constant 0 : index
    %376 = vector.load %arg8[%c0_81, %c0_82] : memref<8x128xf32, #tpu.memory_space<vmem>>, vector<8x128xf32>
    tpu.vector_store %arg8[%c0_81, %c0_82], %375 {strides = array<i32>} : memref<8x128xf32, #tpu.memory_space<vmem>>, vector<8x128xf32>,
    %c0_83 = arith.constant 0 : index
    %c0_84 = arith.constant 0 : index
    %377 = vector.load %arg7[%c0_83, %c0_84] : memref<8x128xf32, #tpu.memory_space<vmem>>, vector<8x128xf32>
    tpu.vector_store %arg7[%c0_83, %c0_84], %375 {strides = array<i32>} : memref<8x128xf32, #tpu.memory_space<vmem>>, vector<8x128xf32>,
    return
  }
  func.func @transform_0(%arg0: i32) -> (i32, i32, i32) {
    %c0_i32 = arith.constant 0 : i32
    %c0_i32_0 = arith.constant 0 : i32
    %c0_i32_1 = arith.constant 0 : i32
    return %arg0, %c0_i32, %c0_i32_0 : i32, i32, i32
  }
  func.func @transform_1(%arg0: i32) -> (i32, i32) {
    %c0_i32 = arith.constant 0 : i32
    %c0_i32_0 = arith.constant 0 : i32
    %c0_i32_1 = arith.constant 0 : i32
    return %c0_i32, %c0_i32_0 : i32, i32
  }
  func.func @transform_2(%arg0: i32) -> (i32, i32) {
    %c0_i32 = arith.constant 0 : i32
    %c0_i32_0 = arith.constant 0 : i32
    %c0_i32_1 = arith.constant 0 : i32
    return %c0_i32, %c0_i32_0 : i32, i32
  }
  func.func @transform_3(%arg0: i32) -> (i32, i32) {
    %c0_i32 = arith.constant 0 : i32
    %c0_i32_0 = arith.constant 0 : i32
    %c0_i32_1 = arith.constant 0 : i32
    return %c0_i32, %c0_i32_0 : i32, i32
  }
  func.func @transform_4(%arg0: i32) -> (i32, i32) {
    %c0_i32 = arith.constant 0 : i32
    %c0_i32_0 = arith.constant 0 : i32
    %c0_i32_1 = arith.constant 0 : i32
    return %c0_i32, %c0_i32_0 : i32, i32
  }
  func.func @transform_5(%arg0: i32) -> (i32, i32, i32) {
    %c0_i32 = arith.constant 0 : i32
    %c0_i32_0 = arith.constant 0 : i32
    %c0_i32_1 = arith.constant 0 : i32
    return %arg0, %c0_i32, %c0_i32_0 : i32, i32, i32
  }
  func.func @transform_6(%arg0: i32) -> (i32, i32) {
    %c0_i32 = arith.constant 0 : i32
    %c0_i32_0 = arith.constant 0 : i32
    %c0_i32_1 = arith.constant 0 : i32
    return %c0_i32, %c0_i32_0 : i32, i32
  }
}

</mosaic_0001>

<llo_original>
// kernel: tpu_custom_call.1
$region0: #{tpu_custom_call.1}
  #allocation0 [shape = 'u32[]', space=smem, size = 0x4, offset = 0x4, fixed_abs, tag = 'smem constant byte address 0x4 - core index']
  #allocation1 [shape = 'u32[72,128]{1,0:T(1,128)}', space=vmem, size = 0x9000, scoped, tag = 'internal scratch']
  #allocation2 [shape = 'f32[8,128]{1,0:T(8,128)}', space=vmem, size = 0x1000, scoped, tag = 'scratch operand']
  %s0 = inlined_call_operand.hbm [shape: f32[8,8,384], index: 0, kind: input, shape index: {}]
  %s1 = inlined_call_operand.vmem [shape: s32[8,1], index: 1, kind: input, shape index: {}]
  %s2 = inlined_call_operand.vmem [shape: f32[8,128], index: 2, kind: input, shape index: {}]
  %s3 = inlined_call_operand.hbm [shape: f32[128,384], index: 3, kind: input, shape index: {}]
  %s4 = inlined_call_operand.vmem [shape: f32[1,128], index: 4, kind: input, shape index: {}]
  %s5 = inlined_call_operand.hbm [shape: f32[8,8,128], index: 5, kind: output, shape index: {0}]
  %s6 = inlined_call_operand.hbm [shape: f32[8,128], index: 6, kind: output, shape index: {1}]
  %7 = xla_tuple %s5, %s6
  %s8 = sld [smem:[#allocation0]]
  $region50: #{tpu_custom_call.1} parent=0
    _
  %s10 = ssub.s32 1, %s8
  %s11 = scalar_select 0, %s10, %s8
  $region1: #{tpu_custom_call.1} parent=0
    #allocation3 [shape = 'u8[98304]{0}', space=vmem, size = 0x18000, scoped, tag = 'input window, operand 0, single buffered']
    #allocation4 [shape = 's32[1]{0}', space=sflag, size = 0x4, scoped, tag = 'scoped memory for tpu_custom_call.1']
    #allocation5 [shape = 's32[1]{0}', space=sflag, size = 0x4, scoped, tag = 'scoped memory for tpu_custom_call.1']
    #allocation6 [shape = 'u8[196608]{0}', space=vmem, size = 0x30000, scoped, tag = 'input window, operand 3, single buffered']
    #allocation7 [shape = 's32[1]{0}', space=sflag, size = 0x4, scoped, tag = 'scoped memory for tpu_custom_call.1']
    #allocation8 [shape = 'u8[32768]{0}', space=vmem, size = 0x8000, scoped, tag = 'output window, operand 0, single buffered']
    #allocation9 [shape = 'u8[4096]{0}', space=vmem, size = 0x1000, scoped, tag = 'output window, operand 1, single buffered']
    #allocation10 [shape = 's32[1]{0}', space=sflag, size = 0x4, scoped, tag = 'scoped memory for tpu_custom_call.1']
    %12 = vsyncpa [#allocation4], 0
    %13 = vsyncpa [#allocation7], 0
    %14 = vsyncpa [#allocation5], 0
    %15 = vsyncpa [#allocation10], 0
    // Predicated region
    $region2: #{tpu_custom_call.1} parent=1 // pred_check
      _
    $region3: #{tpu_custom_call.1} parent=1 // pred_check_branch
      %17 = sbr.rel (0) target = $region5
    $region4: #{tpu_custom_call.1} parent=1 // pred_region
      %19 = vsyncadd [#allocation4], 0
      %s20 = sshll.u32 %s0, 4
      %s21 = int_to_ptr.hbm [resolvable:$true] %s20
      %s22 = sshll.u32 [#allocation3], 4
      %s23 = int_to_ptr.vmem [resolvable:$true] %s22
      %28 = dma.hbm_to_vmem [thread:$0]  %s21, 3072, %s23, [#allocation4], 384, 384, 24
    $region5: #{tpu_custom_call.1} parent=1 // pred_fallthru
      _
    // Predicated region
    $region6: #{tpu_custom_call.1} parent=1 // pred_check
      _
    $region7: #{tpu_custom_call.1} parent=1 // pred_check_branch
      %30 = sbr.rel (0) target = $region9
    $region8: #{tpu_custom_call.1} parent=1 // pred_region
      _
    $region9: #{tpu_custom_call.1} parent=1 // pred_fallthru
      _
    // Predicated region
    $region10: #{tpu_custom_call.1} parent=1 // pred_check
      _
    $region11: #{tpu_custom_call.1} parent=1 // pred_check_branch
      %32 = sbr.rel (0) target = $region13
    $region12: #{tpu_custom_call.1} parent=1 // pred_region
      _
    $region13: #{tpu_custom_call.1} parent=1 // pred_fallthru
      _
    // Predicated region
    $region14: #{tpu_custom_call.1} parent=1 // pred_check
      _
    $region15: #{tpu_custom_call.1} parent=1 // pred_check_branch
      %34 = sbr.rel (0) target = $region17
    $region16: #{tpu_custom_call.1} parent=1 // pred_region
      %36 = vsyncadd [#allocation7], 0
      %s37 = sshll.u32 %s3, 4
      %s38 = int_to_ptr.hbm [resolvable:$true] %s37
      %s39 = sshll.u32 [#allocation6], 4
      %s40 = int_to_ptr.vmem [resolvable:$true] %s39
      %45 = dma.hbm_to_vmem [thread:$0]  %s38, 6144, %s40, [#allocation7], 384, 384, 24
    $region17: #{tpu_custom_call.1} parent=1 // pred_fallthru
      _
    // Predicated region
    $region18: #{tpu_custom_call.1} parent=1 // pred_check
      _
    $region19: #{tpu_custom_call.1} parent=1 // pred_check_branch
      %47 = sbr.rel (0) target = $region21
    $region20: #{tpu_custom_call.1} parent=1 // pred_region
      _
    $region21: #{tpu_custom_call.1} parent=1 // pred_fallthru
      _
    // Predicated region
    $region22: #{tpu_custom_call.1} parent=1 // pred_check
      _
    $region23: #{tpu_custom_call.1} parent=1 // pred_check_branch
      %49 = sbr.rel (0) target = $region25
    $region24: #{tpu_custom_call.1} parent=1 // pred_region
      %51 = dma.done [#allocation4], 3072
    $region25: #{tpu_custom_call.1} parent=1 // pred_fallthru
      _
    // Predicated region
    $region26: #{tpu_custom_call.1} parent=1 // pred_check
      _
    $region27: #{tpu_custom_call.1} parent=1 // pred_check_branch
      %53 = sbr.rel (0) target = $region29
    $region28: #{tpu_custom_call.1} parent=1 // pred_region
      %55 = dma.done [#allocation7], 6144
    $region29: #{tpu_custom_call.1} parent=1 // pred_fallthru
      _
    %p56 = scmp.eq.s32.totalorder 0, 0
    // Predicated region
    $region30: #{tpu_custom_call.1} parent=1 // pred_check
      %p57 = pneg %p56
    $region31: #{tpu_custom_call.1} parent=1 // pred_check_branch
      %59 = sbr.rel (%p57) target = $region33
    $region32: #{tpu_custom_call.1} parent=1 // pred_region
      %v60 = vld [vmem:[%s2] sm:$0xff]
      %61 = vst [vmem:[#allocation2] sm:$0xff] %v60
    $region33: #{tpu_custom_call.1} parent=1 // pred_fallthru
      _
    %v62 = vld [vmem:[%s1] sm:$0xff]
    %v63 = vld [vmem:[#allocation6] sm:$0xff]
    %v64 = vld [vmem:[#allocation6 + $0x8] sm:$0xff]
    %v65 = vld [vmem:[#allocation6 + $0x10] sm:$0xff]
    %v66 = vld [vmem:[#allocation6 + $0x18] sm:$0xff]
    %v67 = vld [vmem:[#allocation6 + $0x20] sm:$0xff]
    %v68 = vld [vmem:[#allocation6 + $0x28] sm:$0xff]
    %v69 = vld [vmem:[#allocation6 + $0x30] sm:$0xff]
    %v70 = vld [vmem:[#allocation6 + $0x38] sm:$0xff]
    %v71 = vld [vmem:[#allocation6 + $0x40] sm:$0xff]
    %v72 = vld [vmem:[#allocation6 + $0x48] sm:$0xff]
    %v73 = vld [vmem:[#allocation6 + $0x50] sm:$0xff]
    %v74 = vld [vmem:[#allocation6 + $0x58] sm:$0xff]
    %v75 = vld [vmem:[#allocation6 + $0x60] sm:$0xff]
    %v76 = vld [vmem:[#allocation6 + $0x68] sm:$0xff]
    %v77 = vld [vmem:[#allocation6 + $0x70] sm:$0xff]
    %v78 = vld [vmem:[#allocation6 + $0x78] sm:$0xff]
    %v79 = vld [vmem:[#allocation6 + $0x80] sm:$0xff]
    %v80 = vld [vmem:[#allocation6 + $0x88] sm:$0xff]
    %v81 = vld [vmem:[#allocation6 + $0x90] sm:$0xff]
    %v82 = vld [vmem:[#allocation6 + $0x98] sm:$0xff]
    %v83 = vld [vmem:[#allocation6 + $0xa0] sm:$0xff]
    %v84 = vld [vmem:[#allocation6 + $0xa8] sm:$0xff]
    %v85 = vld [vmem:[#allocation6 + $0xb0] sm:$0xff]
    %v86 = vld [vmem:[#allocation6 + $0xb8] sm:$0xff]
    %v87 = vld [vmem:[#allocation6 + $0xc0] sm:$0xff]
    %v88 = vld [vmem:[#allocation6 + $0xc8] sm:$0xff]
    %v89 = vld [vmem:[#allocation6 + $0xd0] sm:$0xff]
    %v90 = vld [vmem:[#allocation6 + $0xd8] sm:$0xff]
    %v91 = vld [vmem:[#allocation6 + $0xe0] sm:$0xff]
    %v92 = vld [vmem:[#allocation6 + $0xe8] sm:$0xff]
    %v93 = vld [vmem:[#allocation6 + $0xf0] sm:$0xff]
    %v94 = vld [vmem:[#allocation6 + $0xf8] sm:$0xff]
    %v95 = vld [vmem:[#allocation6 + $0x100] sm:$0xff]
    %v96 = vld [vmem:[#allocation6 + $0x108] sm:$0xff]
    %v97 = vld [vmem:[#allocation6 + $0x110] sm:$0xff]
    %v98 = vld [vmem:[#allocation6 + $0x118] sm:$0xff]
    %v99 = vld [vmem:[#allocation6 + $0x120] sm:$0xff]
    %v100 = vld [vmem:[#allocation6 + $0x128] sm:$0xff]
    %v101 = vld [vmem:[#allocation6 + $0x130] sm:$0xff]
    %v102 = vld [vmem:[#allocation6 + $0x138] sm:$0xff]
    %v103 = vld [vmem:[#allocation6 + $0x140] sm:$0xff]
    %v104 = vld [vmem:[#allocation6 + $0x148] sm:$0xff]
    %v105 = vld [vmem:[#allocation6 + $0x150] sm:$0xff]
    %v106 = vld [vmem:[#allocation6 + $0x158] sm:$0xff]
    %v107 = vld [vmem:[#allocation6 + $0x160] sm:$0xff]
    %v108 = vld [vmem:[#allocation6 + $0x168] sm:$0xff]
    %v109 = vld [vmem:[#allocation6 + $0x170] sm:$0xff]
    %v110 = vld [vmem:[#allocation6 + $0x178] sm:$0xff]
    %v111 = vld [vmem:[%s4] sm:$0x1]
    %s112 = smul.u32 0, 8
    %v113 = vld [vmem:[#allocation2] sm:$0xff]
    %v114 = vld [vmem:[#allocation3] sm:$0xff]
    %v115 = vld [vmem:[#allocation3 + $0x8] sm:$0xff]
    %v116 = vld [vmem:[#allocation3 + $0x10] sm:$0xff]
    %117 = vmatpush.msra.mxu0 %v108
    %118 = vmatpush.msra.mxu0 %v105
    %119 = vmatpush.msra.mxu0 %v102
    %120 = vmatpush.msra.mxu0 %v99
    %121 = vmatpush.msra.mxu0 %v96
    %122 = vmatpush.msra.mxu0 %v93
    %123 = vmatpush.msra.mxu0 %v90
    %124 = vmatpush.msra.mxu0 %v87
    %125 = vmatpush.msra.mxu0 %v84
    %126 = vmatpush.msra.mxu0 %v81
    %127 = vmatpush.msra.mxu0 %v78
    %128 = vmatpush.msra.mxu0 %v75
    %129 = vmatpush.msra.mxu0 %v72
    %130 = vmatpush.msra.mxu0 %v69
    %131 = vmatpush.msra.mxu0 %v66
    %132 = vmatpush.msra.mxu0 %v63
    %133 = vmatmul.f32.gmra.mxu0 %v113
    %v134 = vpop.f32.mrf.mxu0
    %v135 = vadd.f32 0.0, %v134
    %136 = vdwg.mxu0
    %137 = vmatpush.msra.mxu0 %v109
    %138 = vmatpush.msra.mxu0 %v106
    %139 = vmatpush.msra.mxu0 %v103
    %140 = vmatpush.msra.mxu0 %v100
    %141 = vmatpush.msra.mxu0 %v97
    %142 = vmatpush.msra.mxu0 %v94
    %143 = vmatpush.msra.mxu0 %v91
    %144 = vmatpush.msra.mxu0 %v88
    %145 = vmatpush.msra.mxu0 %v85
    %146 = vmatpush.msra.mxu0 %v82
    %147 = vmatpush.msra.mxu0 %v79
    %148 = vmatpush.msra.mxu0 %v76
    %149 = vmatpush.msra.mxu0 %v73
    %150 = vmatpush.msra.mxu0 %v70
    %151 = vmatpush.msra.mxu0 %v67
    %152 = vmatpush.msra.mxu0 %v64
    %153 = vmatmul.f32.gmra.mxu0 %v113
    %v154 = vpop.f32.mrf.mxu0
    %v155 = vadd.f32 0.0, %v154
    %156 = vdwg.mxu0
    %157 = vmatpush.msra.mxu0 %v110
    %158 = vmatpush.msra.mxu0 %v107
    %159 = vmatpush.msra.mxu0 %v104
    %160 = vmatpush.msra.mxu0 %v101
    %161 = vmatpush.msra.mxu0 %v98
    %162 = vmatpush.msra.mxu0 %v95
    %163 = vmatpush.msra.mxu0 %v92
    %164 = vmatpush.msra.mxu0 %v89
    %165 = vmatpush.msra.mxu0 %v86
    %166 = vmatpush.msra.mxu0 %v83
    %167 = vmatpush.msra.mxu0 %v80
    %168 = vmatpush.msra.mxu0 %v77
    %169 = vmatpush.msra.mxu0 %v74
    %170 = vmatpush.msra.mxu0 %v71
    %171 = vmatpush.msra.mxu0 %v68
    %172 = vmatpush.msra.mxu0 %v65
    %173 = vmatmul.f32.gmra.mxu0 %v113
    %v174 = vpop.f32.mrf.mxu0
    %v175 = vadd.f32 0.0, %v174
    %176 = vdwg.mxu0
    %v177 = vadd.f32 %v114, %v135
    %v178 = vxor.u32 %v177, 2147483648
    %v179 = vmul.f32 %v178, 1.442695
    %v180 = vpow.pop %v179
    %v181 = vadd.f32 %v180, 1.0
    %v182 = vrcp.pop %v181
    %v183 = vmul.f32 %v181, %v182
    %v184 = vsub.f32 1.0, %v183
    %v185 = vmul.f32 %v182, %v184
    %v186 = vadd.f32 %v182, %v185
    %vm187 = vweird.f32 %v181
    %vm188 = vweird.f32 %v182
    %vm189 = vmor %vm187, %vm188
    %v190 = vsel %vm189, %v182, %v186
    %v191 = vand.u32 2147483647, %v181
    %vm192 = vcmp.eq.f32.partialorder %v191, 8.507059e+37
    %v193 = vand.u32 %v181, 2147483648
    %v194 = vor.u32 1.1754944e-38, %v193
    %v195 = vsel %vm192, %v194, %v190
    %v196 = vmul.f32 1.0, %v195
    %v197 = vadd.f32 %v115, %v155
    %v198 = vxor.u32 %v197, 2147483648
    %v199 = vmul.f32 %v198, 1.442695
    %v200 = vpow.pop %v199
    %v201 = vadd.f32 %v200, 1.0
    %v202 = vrcp.pop %v201
    %v203 = vmul.f32 %v201, %v202
    %v204 = vsub.f32 1.0, %v203
    %v205 = vmul.f32 %v202, %v204
    %v206 = vadd.f32 %v202, %v205
    %vm207 = vweird.f32 %v201
    %vm208 = vweird.f32 %v202
    %vm209 = vmor %vm207, %vm208
    %v210 = vsel %vm209, %v202, %v206
    %v211 = vand.u32 2147483647, %v201
    %vm212 = vcmp.eq.f32.partialorder %v211, 8.507059e+37
    %v213 = vand.u32 %v201, 2147483648
    %v214 = vor.u32 1.1754944e-38, %v213
    %v215 = vsel %vm212, %v214, %v210
    %v216 = vmul.f32 1.0, %v215
    %v218 = vperm.slane %v111, 0
    %v220 = vadd.f32 %v175, %v218
    %v221 = vmul.f32 %v196, %v220
    %v222 = vadd.f32 %v116, %v221
    %v223 = vtanh.pop %v222
    %v224 = vsub.f32 1.0, %v216
    %v225 = vmul.f32 %v224, %v223
    %v226 = vmul.f32 %v216, %v113
    %v227 = vadd.f32 %v225, %v226
    %v228 = vstv %s112
    %vm229 = vcmp.lt.s32.totalorder %v228, %v62
    %v230 = vsel %vm229, 1, 0
    %231 = vset.pattern.permute.xlu0 0
    %232 = vperm.xlu0 %231, %v230
    %v233 = vpop.permute.xlu0 %232
    %vm234 = vcmp.eq.s32.totalorder %v233, 1
    %v235 = vsel %vm234, %v227, 0.0
    %236 = vst [vmem:[#allocation8] sm:$0xff] %v235
    %v237 = vsel %vm234, %v227, %v113
    %s238 = scalar_lea.vmem [#allocation3], 24
    %v239 = vld [vmem:[%s238] sm:$0xff]
    %v240 = vld [vmem:[%s238 + $0x8] sm:$0xff]
    %v241 = vld [vmem:[%s238 + $0x10] sm:$0xff]
    %242 = vmatpush.msra.mxu0 %v108
    %243 = vmatpush.msra.mxu0 %v105
    %244 = vmatpush.msra.mxu0 %v102
    %245 = vmatpush.msra.mxu0 %v99
    %246 = vmatpush.msra.mxu0 %v96
    %247 = vmatpush.msra.mxu0 %v93
    %248 = vmatpush.msra.mxu0 %v90
    %249 = vmatpush.msra.mxu0 %v87
    %250 = vmatpush.msra.mxu0 %v84
    %251 = vmatpush.msra.mxu0 %v81
    %252 = vmatpush.msra.mxu0 %v78
    %253 = vmatpush.msra.mxu0 %v75
    %254 = vmatpush.msra.mxu0 %v72
    %255 = vmatpush.msra.mxu0 %v69
    %256 = vmatpush.msra.mxu0 %v66
    %257 = vmatpush.msra.mxu0 %v63
    %258 = vmatmul.f32.gmra.mxu0 %v237
    %v259 = vpop.f32.mrf.mxu0
    %v260 = vadd.f32 0.0, %v259
    %261 = vdwg.mxu0
    %262 = vmatpush.msra.mxu0 %v109
    %263 = vmatpush.msra.mxu0 %v106
    %264 = vmatpush.msra.mxu0 %v103
    %265 = vmatpush.msra.mxu0 %v100
    %266 = vmatpush.msra.mxu0 %v97
    %267 = vmatpush.msra.mxu0 %v94
    %268 = vmatpush.msra.mxu0 %v91
    %269 = vmatpush.msra.mxu0 %v88
    %270 = vmatpush.msra.mxu0 %v85
    %271 = vmatpush.msra.mxu0 %v82
    %272 = vmatpush.msra.mxu0 %v79
    %273 = vmatpush.msra.mxu0 %v76
    %274 = vmatpush.msra.mxu0 %v73
    %275 = vmatpush.msra.mxu0 %v70
    %276 = vmatpush.msra.mxu0 %v67
    %277 = vmatpush.msra.mxu0 %v64
    %278 = vmatmul.f32.gmra.mxu0 %v237
    %v279 = vpop.f32.mrf.mxu0
    %v280 = vadd.f32 0.0, %v279
    %281 = vdwg.mxu0
    %282 = vmatpush.msra.mxu0 %v110
    %283 = vmatpush.msra.mxu0 %v107
    %284 = vmatpush.msra.mxu0 %v104
    %285 = vmatpush.msra.mxu0 %v101
    %286 = vmatpush.msra.mxu0 %v98
    %287 = vmatpush.msra.mxu0 %v95
    %288 = vmatpush.msra.mxu0 %v92
    %289 = vmatpush.msra.mxu0 %v89
    %290 = vmatpush.msra.mxu0 %v86
    %291 = vmatpush.msra.mxu0 %v83
    %292 = vmatpush.msra.mxu0 %v80
    %293 = vmatpush.msra.mxu0 %v77
    %294 = vmatpush.msra.mxu0 %v74
    %295 = vmatpush.msra.mxu0 %v71
    %296 = vmatpush.msra.mxu0 %v68
    %297 = vmatpush.msra.mxu0 %v65
    %298 = vmatmul.f32.gmra.mxu0 %v237
    %v299 = vpop.f32.mrf.mxu0
    %v300 = vadd.f32 0.0, %v299
    %301 = vdwg.mxu0
    %v302 = vadd.f32 %v239, %v260
    %v303 = vxor.u32 %v302, 2147483648
    %v304 = vmul.f32 %v303, 1.442695
    %v305 = vpow.pop %v304
    %v306 = vadd.f32 %v305, 1.0
    %v307 = vrcp.pop %v306
    %v308 = vmul.f32 %v306, %v307
    %v309 = vsub.f32 1.0, %v308
    %v310 = vmul.f32 %v307, %v309
    %v311 = vadd.f32 %v307, %v310
    %vm312 = vweird.f32 %v306
    %vm313 = vweird.f32 %v307
    %vm314 = vmor %vm312, %vm313
    %v315 = vsel %vm314, %v307, %v311
    %v316 = vand.u32 2147483647, %v306
    %vm317 = vcmp.eq.f32.partialorder %v316, 8.507059e+37
    %v318 = vand.u32 %v306, 2147483648
    %v319 = vor.u32 1.1754944e-38, %v318
    %v320 = vsel %vm317, %v319, %v315
    %v321 = vmul.f32 1.0, %v320
    %v322 = vadd.f32 %v240, %v280
    %v323 = vxor.u32 %v322, 2147483648
    %v324 = vmul.f32 %v323, 1.442695
    %v325 = vpow.pop %v324
    %v326 = vadd.f32 %v325, 1.0
    %v327 = vrcp.pop %v326
    %v328 = vmul.f32 %v326, %v327
    %v329 = vsub.f32 1.0, %v328
    %v330 = vmul.f32 %v327, %v329
    %v331 = vadd.f32 %v327, %v330
    %vm332 = vweird.f32 %v326
    %vm333 = vweird.f32 %v327
    %vm334 = vmor %vm332, %vm333
    %v335 = vsel %vm334, %v327, %v331
    %v336 = vand.u32 2147483647, %v326
    %vm337 = vcmp.eq.f32.partialorder %v336, 8.507059e+37
    %v338 = vand.u32 %v326, 2147483648
    %v339 = vor.u32 1.1754944e-38, %v338
    %v340 = vsel %vm337, %v339, %v335
    %v341 = vmul.f32 1.0, %v340
    %v342 = vadd.f32 %v300, %v218
    %v343 = vmul.f32 %v321, %v342
    %v344 = vadd.f32 %v241, %v343
    %v345 = vtanh.pop %v344
    %v346 = vsub.f32 1.0, %v341
    %v347 = vmul.f32 %v346, %v345
    %v348 = vmul.f32 %v341, %v237
    %v349 = vadd.f32 %v347, %v348
    %s350 = sadd.s32 %s112, 1
    %v351 = vstv %s350
    %vm352 = vcmp.lt.s32.totalorder %v351, %v62
    %v353 = vsel %vm352, 1, 0
    %354 = vset.pattern.permute.xlu0 0
    %355 = vperm.xlu0 %354, %v353
    %v356 = vpop.permute.xlu0 %355
    %vm357 = vcmp.eq.s32.totalorder %v356, 1
    %v358 = vsel %vm357, %v349, 0.0
    %s359 = scalar_lea.vmem [#allocation8], 8
    %360 = vst [vmem:[%s359] sm:$0xff] %v358
    %v361 = vsel %vm357, %v349, %v237
    %s362 = scalar_lea.vmem [#allocation3], 48
    %v363 = vld [vmem:[%s362] sm:$0xff]
    %v364 = vld [vmem:[%s362 + $0x8] sm:$0xff]
    %v365 = vld [vmem:[%s362 + $0x10] sm:$0xff]
    %366 = vmatpush.msra.mxu0 %v108
    %367 = vmatpush.msra.mxu0 %v105
    %368 = vmatpush.msra.mxu0 %v102
    %369 = vmatpush.msra.mxu0 %v99
    %370 = vmatpush.msra.mxu0 %v96
    %371 = vmatpush.msra.mxu0 %v93
    %372 = vmatpush.msra.mxu0 %v90
    %373 = vmatpush.msra.mxu0 %v87
    %374 = vmatpush.msra.mxu0 %v84
    %375 = vmatpush.msra.mxu0 %v81
    %376 = vmatpush.msra.mxu0 %v78
    %377 = vmatpush.msra.mxu0 %v75
    %378 = vmatpush.msra.mxu0 %v72
    %379 = vmatpush.msra.mxu0 %v69
    %380 = vmatpush.msra.mxu0 %v66
    %381 = vmatpush.msra.mxu0 %v63
    %382 = vmatmul.f32.gmra.mxu0 %v361
    %v383 = vpop.f32.mrf.mxu0
    %v384 = vadd.f32 0.0, %v383
    %385 = vdwg.mxu0
    %386 = vmatpush.msra.mxu0 %v109
    %387 = vmatpush.msra.mxu0 %v106
    %388 = vmatpush.msra.mxu0 %v103
    %389 = vmatpush.msra.mxu0 %v100
    %390 = vmatpush.msra.mxu0 %v97
    %391 = vmatpush.msra.mxu0 %v94
    %392 = vmatpush.msra.mxu0 %v91
    %393 = vmatpush.msra.mxu0 %v88
    %394 = vmatpush.msra.mxu0 %v85
    %395 = vmatpush.msra.mxu0 %v82
    %396 = vmatpush.msra.mxu0 %v79
    %397 = vmatpush.msra.mxu0 %v76
    %398 = vmatpush.msra.mxu0 %v73
    %399 = vmatpush.msra.mxu0 %v70
    %400 = vmatpush.msra.mxu0 %v67
    %401 = vmatpush.msra.mxu0 %v64
    %402 = vmatmul.f32.gmra.mxu0 %v361
    %v403 = vpop.f32.mrf.mxu0
    %v404 = vadd.f32 0.0, %v403
    %405 = vdwg.mxu0
    %406 = vmatpush.msra.mxu0 %v110
    %407 = vmatpush.msra.mxu0 %v107
    %408 = vmatpush.msra.mxu0 %v104
    %409 = vmatpush.msra.mxu0 %v101
    %410 = vmatpush.msra.mxu0 %v98
    %411 = vmatpush.msra.mxu0 %v95
    %412 = vmatpush.msra.mxu0 %v92
    %413 = vmatpush.msra.mxu0 %v89
    %414 = vmatpush.msra.mxu0 %v86
    %415 = vmatpush.msra.mxu0 %v83
    %416 = vmatpush.msra.mxu0 %v80
    %417 = vmatpush.msra.mxu0 %v77
    %418 = vmatpush.msra.mxu0 %v74
    %419 = vmatpush.msra.mxu0 %v71
    %420 = vmatpush.msra.mxu0 %v68
    %421 = vmatpush.msra.mxu0 %v65
    %422 = vmatmul.f32.gmra.mxu0 %v361
    %v423 = vpop.f32.mrf.mxu0
    %v424 = vadd.f32 0.0, %v423
    %425 = vdwg.mxu0
    %v426 = vadd.f32 %v363, %v384
    %v427 = vxor.u32 %v426, 2147483648
    %v428 = vmul.f32 %v427, 1.442695
    %v429 = vpow.pop %v428
    %v430 = vadd.f32 %v429, 1.0
    %v431 = vrcp.pop %v430
    %v432 = vmul.f32 %v430, %v431
    %v433 = vsub.f32 1.0, %v432
    %v434 = vmul.f32 %v431, %v433
    %v435 = vadd.f32 %v431, %v434
    %vm436 = vweird.f32 %v430
    %vm437 = vweird.f32 %v431
    %vm438 = vmor %vm436, %vm437
    %v439 = vsel %vm438, %v431, %v435
    %v440 = vand.u32 2147483647, %v430
    %vm441 = vcmp.eq.f32.partialorder %v440, 8.507059e+37
    %v442 = vand.u32 %v430, 2147483648
    %v443 = vor.u32 1.1754944e-38, %v442
    %v444 = vsel %vm441, %v443, %v439
    %v445 = vmul.f32 1.0, %v444
    %v446 = vadd.f32 %v364, %v404
    %v447 = vxor.u32 %v446, 2147483648
    %v448 = vmul.f32 %v447, 1.442695
    %v449 = vpow.pop %v448
    %v450 = vadd.f32 %v449, 1.0
    %v451 = vrcp.pop %v450
    %v452 = vmul.f32 %v450, %v451
    %v453 = vsub.f32 1.0, %v452
    %v454 = vmul.f32 %v451, %v453
    %v455 = vadd.f32 %v451, %v454
    %vm456 = vweird.f32 %v450
    %vm457 = vweird.f32 %v451
    %vm458 = vmor %vm456, %vm457
    %v459 = vsel %vm458, %v451, %v455
    %v460 = vand.u32 2147483647, %v450
    %vm461 = vcmp.eq.f32.partialorder %v460, 8.507059e+37
    %v462 = vand.u32 %v450, 2147483648
    %v463 = vor.u32 1.1754944e-38, %v462
    %v464 = vsel %vm461, %v463, %v459
    %v465 = vmul.f32 1.0, %v464
    %v466 = vadd.f32 %v424, %v218
    %v467 = vmul.f32 %v445, %v466
    %v468 = vadd.f32 %v365, %v467
    %v469 = vtanh.pop %v468
    %v470 = vsub.f32 1.0, %v465
    %v471 = vmul.f32 %v470, %v469
    %v472 = vmul.f32 %v465, %v361
    %v473 = vadd.f32 %v471, %v472
    %s474 = sadd.s32 %s112, 2
    %v475 = vstv %s474
    %vm476 = vcmp.lt.s32.totalorder %v475, %v62
    %v477 = vsel %vm476, 1, 0
    %478 = vset.pattern.permute.xlu0 0
    %479 = vperm.xlu0 %478, %v477
    %v480 = vpop.permute.xlu0 %479
    %vm481 = vcmp.eq.s32.totalorder %v480, 1
    %v482 = vsel %vm481, %v473, 0.0
    %s483 = scalar_lea.vmem [#allocation8], 16
    %484 = vst [vmem:[%s483] sm:$0xff] %v482
    %v485 = vsel %vm481, %v473, %v361
    %s486 = scalar_lea.vmem [#allocation3], 72
    %v487 = vld [vmem:[%s486] sm:$0xff]
    %v488 = vld [vmem:[%s486 + $0x8] sm:$0xff]
    %v489 = vld [vmem:[%s486 + $0x10] sm:$0xff]
    %490 = vmatpush.msra.mxu0 %v108
    %491 = vmatpush.msra.mxu0 %v105
    %492 = vmatpush.msra.mxu0 %v102
    %493 = vmatpush.msra.mxu0 %v99
    %494 = vmatpush.msra.mxu0 %v96
    %495 = vmatpush.msra.mxu0 %v93
    %496 = vmatpush.msra.mxu0 %v90
    %497 = vmatpush.msra.mxu0 %v87
    %498 = vmatpush.msra.mxu0 %v84
    %499 = vmatpush.msra.mxu0 %v81
    %500 = vmatpush.msra.mxu0 %v78
    %501 = vmatpush.msra.mxu0 %v75
    %502 = vmatpush.msra.mxu0 %v72
    %503 = vmatpush.msra.mxu0 %v69
    %504 = vmatpush.msra.mxu0 %v66
    %505 = vmatpush.msra.mxu0 %v63
    %506 = vmatmul.f32.gmra.mxu0 %v485
    %v507 = vpop.f32.mrf.mxu0
    %v508 = vadd.f32 0.0, %v507
    %509 = vdwg.mxu0
    %510 = vmatpush.msra.mxu0 %v109
    %511 = vmatpush.msra.mxu0 %v106
    %512 = vmatpush.msra.mxu0 %v103
    %513 = vmatpush.msra.mxu0 %v100
    %514 = vmatpush.msra.mxu0 %v97
    %515 = vmatpush.msra.mxu0 %v94
    %516 = vmatpush.msra.mxu0 %v91
    %517 = vmatpush.msra.mxu0 %v88
    %518 = vmatpush.msra.mxu0 %v85
    %519 = vmatpush.msra.mxu0 %v82
    %520 = vmatpush.msra.mxu0 %v79
    %521 = vmatpush.msra.mxu0 %v76
    %522 = vmatpush.msra.mxu0 %v73
    %523 = vmatpush.msra.mxu0 %v70
    %524 = vmatpush.msra.mxu0 %v67
    %525 = vmatpush.msra.mxu0 %v64
    %526 = vmatmul.f32.gmra.mxu0 %v485
    %v527 = vpop.f32.mrf.mxu0
    %v528 = vadd.f32 0.0, %v527
    %529 = vdwg.mxu0
    %530 = vmatpush.msra.mxu0 %v110
    %531 = vmatpush.msra.mxu0 %v107
    %532 = vmatpush.msra.mxu0 %v104
    %533 = vmatpush.msra.mxu0 %v101
    %534 = vmatpush.msra.mxu0 %v98
    %535 = vmatpush.msra.mxu0 %v95
    %536 = vmatpush.msra.mxu0 %v92
    %537 = vmatpush.msra.mxu0 %v89
    %538 = vmatpush.msra.mxu0 %v86
    %539 = vmatpush.msra.mxu0 %v83
    %540 = vmatpush.msra.mxu0 %v80
    %541 = vmatpush.msra.mxu0 %v77
    %542 = vmatpush.msra.mxu0 %v74
    %543 = vmatpush.msra.mxu0 %v71
    %544 = vmatpush.msra.mxu0 %v68
    %545 = vmatpush.msra.mxu0 %v65
    %546 = vmatmul.f32.gmra.mxu0 %v485
    %v547 = vpop.f32.mrf.mxu0
    %v548 = vadd.f32 0.0, %v547
    %549 = vdwg.mxu0
    %v550 = vadd.f32 %v487, %v508
    %v551 = vxor.u32 %v550, 2147483648
    %v552 = vmul.f32 %v551, 1.442695
    %v553 = vpow.pop %v552
    %v554 = vadd.f32 %v553, 1.0
    %v555 = vrcp.pop %v554
    %v556 = vmul.f32 %v554, %v555
    %v557 = vsub.f32 1.0, %v556
    %v558 = vmul.f32 %v555, %v557
    %v559 = vadd.f32 %v555, %v558
    %vm560 = vweird.f32 %v554
    %vm561 = vweird.f32 %v555
    %vm562 = vmor %vm560, %vm561
    %v563 = vsel %vm562, %v555, %v559
    %v564 = vand.u32 2147483647, %v554
    %vm565 = vcmp.eq.f32.partialorder %v564, 8.507059e+37
    %v566 = vand.u32 %v554, 2147483648
    %v567 = vor.u32 1.1754944e-38, %v566
    %v568 = vsel %vm565, %v567, %v563
    %v569 = vmul.f32 1.0, %v568
    %v570 = vadd.f32 %v488, %v528
    %v571 = vxor.u32 %v570, 2147483648
    %v572 = vmul.f32 %v571, 1.442695
    %v573 = vpow.pop %v572
    %v574 = vadd.f32 %v573, 1.0
    %v575 = vrcp.pop %v574
    %v576 = vmul.f32 %v574, %v575
    %v577 = vsub.f32 1.0, %v576
    %v578 = vmul.f32 %v575, %v577
    %v579 = vadd.f32 %v575, %v578
    %vm580 = vweird.f32 %v574
    %vm581 = vweird.f32 %v575
    %vm582 = vmor %vm580, %vm581
    %v583 = vsel %vm582, %v575, %v579
    %v584 = vand.u32 2147483647, %v574
    %vm585 = vcmp.eq.f32.partialorder %v584, 8.507059e+37
    %v586 = vand.u32 %v574, 2147483648
    %v587 = vor.u32 1.1754944e-38, %v586
    %v588 = vsel %vm585, %v587, %v583
    %v589 = vmul.f32 1.0, %v588
    %v590 = vadd.f32 %v548, %v218
    %v591 = vmul.f32 %v569, %v590
    %v592 = vadd.f32 %v489, %v591
    %v593 = vtanh.pop %v592
    %v594 = vsub.f32 1.0, %v589
    %v595 = vmul.f32 %v594, %v593
    %v596 = vmul.f32 %v589, %v485
    %v597 = vadd.f32 %v595, %v596
    %s598 = sadd.s32 %s112, 3
    %v599 = vstv %s598
    %vm600 = vcmp.lt.s32.totalorder %v599, %v62
    %v601 = vsel %vm600, 1, 0
    %602 = vset.pattern.permute.xlu0 0
    %603 = vperm.xlu0 %602, %v601
    %v604 = vpop.permute.xlu0 %603
    %vm605 = vcmp.eq.s32.totalorder %v604, 1
    %v606 = vsel %vm605, %v597, 0.0
    %s607 = scalar_lea.vmem [#allocation8], 24
    %608 = vst [vmem:[%s607] sm:$0xff] %v606
    %v609 = vsel %vm605, %v597, %v485
    %s610 = scalar_lea.vmem [#allocation3], 96
    %v611 = vld [vmem:[%s610] sm:$0xff]
    %v612 = vld [vmem:[%s610 + $0x8] sm:$0xff]
    %v613 = vld [vmem:[%s610 + $0x10] sm:$0xff]
    %614 = vmatpush.msra.mxu0 %v108
    %615 = vmatpush.msra.mxu0 %v105
    %616 = vmatpush.msra.mxu0 %v102
    %617 = vmatpush.msra.mxu0 %v99
    %618 = vmatpush.msra.mxu0 %v96
    %619 = vmatpush.msra.mxu0 %v93
    %620 = vmatpush.msra.mxu0 %v90
    %621 = vmatpush.msra.mxu0 %v87
    %622 = vmatpush.msra.mxu0 %v84
    %623 = vmatpush.msra.mxu0 %v81
    %624 = vmatpush.msra.mxu0 %v78
    %625 = vmatpush.msra.mxu0 %v75
    %626 = vmatpush.msra.mxu0 %v72
    %627 = vmatpush.msra.mxu0 %v69
    %628 = vmatpush.msra.mxu0 %v66
    %629 = vmatpush.msra.mxu0 %v63
    %630 = vmatmul.f32.gmra.mxu0 %v609
    %v631 = vpop.f32.mrf.mxu0
    %v632 = vadd.f32 0.0, %v631
    %633 = vdwg.mxu0
    %634 = vmatpush.msra.mxu0 %v109
    %635 = vmatpush.msra.mxu0 %v106
    %636 = vmatpush.msra.mxu0 %v103
    %637 = vmatpush.msra.mxu0 %v100
    %638 = vmatpush.msra.mxu0 %v97
    %639 = vmatpush.msra.mxu0 %v94
    %640 = vmatpush.msra.mxu0 %v91
    %641 = vmatpush.msra.mxu0 %v88
    %642 = vmatpush.msra.mxu0 %v85
    %643 = vmatpush.msra.mxu0 %v82
    %644 = vmatpush.msra.mxu0 %v79
    %645 = vmatpush.msra.mxu0 %v76
    %646 = vmatpush.msra.mxu0 %v73
    %647 = vmatpush.msra.mxu0 %v70
    %648 = vmatpush.msra.mxu0 %v67
    %649 = vmatpush.msra.mxu0 %v64
    %650 = vmatmul.f32.gmra.mxu0 %v609
    %v651 = vpop.f32.mrf.mxu0
    %v652 = vadd.f32 0.0, %v651
    %653 = vdwg.mxu0
    %654 = vmatpush.msra.mxu0 %v110
    %655 = vmatpush.msra.mxu0 %v107
    %656 = vmatpush.msra.mxu0 %v104
    %657 = vmatpush.msra.mxu0 %v101
    %658 = vmatpush.msra.mxu0 %v98
    %659 = vmatpush.msra.mxu0 %v95
    %660 = vmatpush.msra.mxu0 %v92
    %661 = vmatpush.msra.mxu0 %v89
    %662 = vmatpush.msra.mxu0 %v86
    %663 = vmatpush.msra.mxu0 %v83
    %664 = vmatpush.msra.mxu0 %v80
    %665 = vmatpush.msra.mxu0 %v77
    %666 = vmatpush.msra.mxu0 %v74
    %667 = vmatpush.msra.mxu0 %v71
    %668 = vmatpush.msra.mxu0 %v68
    %669 = vmatpush.msra.mxu0 %v65
    %670 = vmatmul.f32.gmra.mxu0 %v609
    %v671 = vpop.f32.mrf.mxu0
    %v672 = vadd.f32 0.0, %v671
    %673 = vdwg.mxu0
    %v674 = vadd.f32 %v611, %v632
    %v675 = vxor.u32 %v674, 2147483648
    %v676 = vmul.f32 %v675, 1.442695
    %v677 = vpow.pop %v676
    %v678 = vadd.f32 %v677, 1.0
    %v679 = vrcp.pop %v678
    %v680 = vmul.f32 %v678, %v679
    %v681 = vsub.f32 1.0, %v680
    %v682 = vmul.f32 %v679, %v681
    %v683 = vadd.f32 %v679, %v682
    %vm684 = vweird.f32 %v678
    %vm685 = vweird.f32 %v679
    %vm686 = vmor %vm684, %vm685
    %v687 = vsel %vm686, %v679, %v683
    %v688 = vand.u32 2147483647, %v678
    %vm689 = vcmp.eq.f32.partialorder %v688, 8.507059e+37
    %v690 = vand.u32 %v678, 2147483648
    %v691 = vor.u32 1.1754944e-38, %v690
    %v692 = vsel %vm689, %v691, %v687
    %v693 = vmul.f32 1.0, %v692
    %v694 = vadd.f32 %v612, %v652
    %v695 = vxor.u32 %v694, 2147483648
    %v696 = vmul.f32 %v695, 1.442695
    %v697 = vpow.pop %v696
    %v698 = vadd.f32 %v697, 1.0
    %v699 = vrcp.pop %v698
    %v700 = vmul.f32 %v698, %v699
    %v701 = vsub.f32 1.0, %v700
    %v702 = vmul.f32 %v699, %v701
    %v703 = vadd.f32 %v699, %v702
    %vm704 = vweird.f32 %v698
    %vm705 = vweird.f32 %v699
    %vm706 = vmor %vm704, %vm705
    %v707 = vsel %vm706, %v699, %v703
    %v708 = vand.u32 2147483647, %v698
    %vm709 = vcmp.eq.f32.partialorder %v708, 8.507059e+37
    %v710 = vand.u32 %v698, 2147483648
    %v711 = vor.u32 1.1754944e-38, %v710
    %v712 = vsel %vm709, %v711, %v707
    %v713 = vmul.f32 1.0, %v712
    %v714 = vadd.f32 %v672, %v218
    %v715 = vmul.f32 %v693, %v714
    %v716 = vadd.f32 %v613, %v715
    %v717 = vtanh.pop %v716
    %v718 = vsub.f32 1.0, %v713
    %v719 = vmul.f32 %v718, %v717
    %v720 = vmul.f32 %v713, %v609
    %v721 = vadd.f32 %v719, %v720
    %s722 = sadd.s32 %s112, 4
    %v723 = vstv %s722
    %vm724 = vcmp.lt.s32.totalorder %v723, %v62
    %v725 = vsel %vm724, 1, 0
    %726 = vset.pattern.permute.xlu0 0
    %727 = vperm.xlu0 %726, %v725
    %v728 = vpop.permute.xlu0 %727
    %vm729 = vcmp.eq.s32.totalorder %v728, 1
    %v730 = vsel %vm729, %v721, 0.0
    %s731 = scalar_lea.vmem [#allocation8], 32
    %732 = vst [vmem:[%s731] sm:$0xff] %v730
    %v733 = vsel %vm729, %v721, %v609
    %s734 = scalar_lea.vmem [#allocation3], 120
    %v735 = vld [vmem:[%s734] sm:$0xff]
    %v736 = vld [vmem:[%s734 + $0x8] sm:$0xff]
    %v737 = vld [vmem:[%s734 + $0x10] sm:$0xff]
    %738 = vmatpush.msra.mxu0 %v108
    %739 = vmatpush.msra.mxu0 %v105
    %740 = vmatpush.msra.mxu0 %v102
    %741 = vmatpush.msra.mxu0 %v99
    %742 = vmatpush.msra.mxu0 %v96
    %743 = vmatpush.msra.mxu0 %v93
    %744 = vmatpush.msra.mxu0 %v90
    %745 = vmatpush.msra.mxu0 %v87
    %746 = vmatpush.msra.mxu0 %v84
    %747 = vmatpush.msra.mxu0 %v81
    %748 = vmatpush.msra.mxu0 %v78
    %749 = vmatpush.msra.mxu0 %v75
    %750 = vmatpush.msra.mxu0 %v72
    %751 = vmatpush.msra.mxu0 %v69
    %752 = vmatpush.msra.mxu0 %v66
    %753 = vmatpush.msra.mxu0 %v63
    %754 = vmatmul.f32.gmra.mxu0 %v733
    %v755 = vpop.f32.mrf.mxu0
    %v756 = vadd.f32 0.0, %v755
    %757 = vdwg.mxu0
    %758 = vmatpush.msra.mxu0 %v109
    %759 = vmatpush.msra.mxu0 %v106
    %760 = vmatpush.msra.mxu0 %v103
    %761 = vmatpush.msra.mxu0 %v100
    %762 = vmatpush.msra.mxu0 %v97
    %763 = vmatpush.msra.mxu0 %v94
    %764 = vmatpush.msra.mxu0 %v91
    %765 = vmatpush.msra.mxu0 %v88
    %766 = vmatpush.msra.mxu0 %v85
    %767 = vmatpush.msra.mxu0 %v82
    %768 = vmatpush.msra.mxu0 %v79
    %769 = vmatpush.msra.mxu0 %v76
    %770 = vmatpush.msra.mxu0 %v73
    %771 = vmatpush.msra.mxu0 %v70
    %772 = vmatpush.msra.mxu0 %v67
    %773 = vmatpush.msra.mxu0 %v64
    %774 = vmatmul.f32.gmra.mxu0 %v733
    %v775 = vpop.f32.mrf.mxu0
    %v776 = vadd.f32 0.0, %v775
    %777 = vdwg.mxu0
    %778 = vmatpush.msra.mxu0 %v110
    %779 = vmatpush.msra.mxu0 %v107
    %780 = vmatpush.msra.mxu0 %v104
    %781 = vmatpush.msra.mxu0 %v101
    %782 = vmatpush.msra.mxu0 %v98
    %783 = vmatpush.msra.mxu0 %v95
    %784 = vmatpush.msra.mxu0 %v92
    %785 = vmatpush.msra.mxu0 %v89
    %786 = vmatpush.msra.mxu0 %v86
    %787 = vmatpush.msra.mxu0 %v83
    %788 = vmatpush.msra.mxu0 %v80
    %789 = vmatpush.msra.mxu0 %v77
    %790 = vmatpush.msra.mxu0 %v74
    %791 = vmatpush.msra.mxu0 %v71
    %792 = vmatpush.msra.mxu0 %v68
    %793 = vmatpush.msra.mxu0 %v65
    %794 = vmatmul.f32.gmra.mxu0 %v733
    %v795 = vpop.f32.mrf.mxu0
    %v796 = vadd.f32 0.0, %v795
    %797 = vdwg.mxu0
    %v798 = vadd.f32 %v735, %v756
    %v799 = vxor.u32 %v798, 2147483648
    %v800 = vmul.f32 %v799, 1.442695
    %v801 = vpow.pop %v800
    %v802 = vadd.f32 %v801, 1.0
    %v803 = vrcp.pop %v802
    %v804 = vmul.f32 %v802, %v803
    %v805 = vsub.f32 1.0, %v804
    %v806 = vmul.f32 %v803, %v805
    %v807 = vadd.f32 %v803, %v806
    %vm808 = vweird.f32 %v802
    %vm809 = vweird.f32 %v803
    %vm810 = vmor %vm808, %vm809
    %v811 = vsel %vm810, %v803, %v807
    %v812 = vand.u32 2147483647, %v802
    %vm813 = vcmp.eq.f32.partialorder %v812, 8.507059e+37
    %v814 = vand.u32 %v802, 2147483648
    %v815 = vor.u32 1.1754944e-38, %v814
    %v816 = vsel %vm813, %v815, %v811
    %v817 = vmul.f32 1.0, %v816
    %v818 = vadd.f32 %v736, %v776
    %v819 = vxor.u32 %v818, 2147483648
    %v820 = vmul.f32 %v819, 1.442695
    %v821 = vpow.pop %v820
    %v822 = vadd.f32 %v821, 1.0
    %v823 = vrcp.pop %v822
    %v824 = vmul.f32 %v822, %v823
    %v825 = vsub.f32 1.0, %v824
    %v826 = vmul.f32 %v823, %v825
    %v827 = vadd.f32 %v823, %v826
    %vm828 = vweird.f32 %v822
    %vm829 = vweird.f32 %v823
    %vm830 = vmor %vm828, %vm829
    %v831 = vsel %vm830, %v823, %v827
    %v832 = vand.u32 2147483647, %v822
    %vm833 = vcmp.eq.f32.partialorder %v832, 8.507059e+37
    %v834 = vand.u32 %v822, 2147483648
    %v835 = vor.u32 1.1754944e-38, %v834
    %v836 = vsel %vm833, %v835, %v831
    %v837 = vmul.f32 1.0, %v836
    %v838 = vadd.f32 %v796, %v218
    %v839 = vmul.f32 %v817, %v838
    %v840 = vadd.f32 %v737, %v839
    %v841 = vtanh.pop %v840
    %v842 = vsub.f32 1.0, %v837
    %v843 = vmul.f32 %v842, %v841
    %v844 = vmul.f32 %v837, %v733
    %v845 = vadd.f32 %v843, %v844
    %s846 = sadd.s32 %s112, 5
    %v847 = vstv %s846
    %vm848 = vcmp.lt.s32.totalorder %v847, %v62
    %v849 = vsel %vm848, 1, 0
    %850 = vset.pattern.permute.xlu0 0
    %851 = vperm.xlu0 %850, %v849
    %v852 = vpop.permute.xlu0 %851
    %vm853 = vcmp.eq.s32.totalorder %v852, 1
    %v854 = vsel %vm853, %v845, 0.0
    %s855 = scalar_lea.vmem [#allocation8], 40
    %856 = vst [vmem:[%s855] sm:$0xff] %v854
    %v857 = vsel %vm853, %v845, %v733
    %s858 = scalar_lea.vmem [#allocation3], 144
    %v859 = vld [vmem:[%s858] sm:$0xff]
    %v860 = vld [vmem:[%s858 + $0x8] sm:$0xff]
    %v861 = vld [vmem:[%s858 + $0x10] sm:$0xff]
    %862 = vmatpush.msra.mxu0 %v108
    %863 = vmatpush.msra.mxu0 %v105
    %864 = vmatpush.msra.mxu0 %v102
    %865 = vmatpush.msra.mxu0 %v99
    %866 = vmatpush.msra.mxu0 %v96
    %867 = vmatpush.msra.mxu0 %v93
    %868 = vmatpush.msra.mxu0 %v90
    %869 = vmatpush.msra.mxu0 %v87
    %870 = vmatpush.msra.mxu0 %v84
    %871 = vmatpush.msra.mxu0 %v81
    %872 = vmatpush.msra.mxu0 %v78
    %873 = vmatpush.msra.mxu0 %v75
    %874 = vmatpush.msra.mxu0 %v72
    %875 = vmatpush.msra.mxu0 %v69
    %876 = vmatpush.msra.mxu0 %v66
    %877 = vmatpush.msra.mxu0 %v63
    %878 = vmatmul.f32.gmra.mxu0 %v857
    %v879 = vpop.f32.mrf.mxu0
    %v880 = vadd.f32 0.0, %v879
    %881 = vdwg.mxu0
    %882 = vmatpush.msra.mxu0 %v109
    %883 = vmatpush.msra.mxu0 %v106
    %884 = vmatpush.msra.mxu0 %v103
    %885 = vmatpush.msra.mxu0 %v100
    %886 = vmatpush.msra.mxu0 %v97
    %887 = vmatpush.msra.mxu0 %v94
    %888 = vmatpush.msra.mxu0 %v91
    %889 = vmatpush.msra.mxu0 %v88
    %890 = vmatpush.msra.mxu0 %v85
    %891 = vmatpush.msra.mxu0 %v82
    %892 = vmatpush.msra.mxu0 %v79
    %893 = vmatpush.msra.mxu0 %v76
    %894 = vmatpush.msra.mxu0 %v73
    %895 = vmatpush.msra.mxu0 %v70
    %896 = vmatpush.msra.mxu0 %v67
    %897 = vmatpush.msra.mxu0 %v64
    %898 = vmatmul.f32.gmra.mxu0 %v857
    %v899 = vpop.f32.mrf.mxu0
    %v900 = vadd.f32 0.0, %v899
    %901 = vdwg.mxu0
    %902 = vmatpush.msra.mxu0 %v110
    %903 = vmatpush.msra.mxu0 %v107
    %904 = vmatpush.msra.mxu0 %v104
    %905 = vmatpush.msra.mxu0 %v101
    %906 = vmatpush.msra.mxu0 %v98
    %907 = vmatpush.msra.mxu0 %v95
    %908 = vmatpush.msra.mxu0 %v92
    %909 = vmatpush.msra.mxu0 %v89
    %910 = vmatpush.msra.mxu0 %v86
    %911 = vmatpush.msra.mxu0 %v83
    %912 = vmatpush.msra.mxu0 %v80
    %913 = vmatpush.msra.mxu0 %v77
    %914 = vmatpush.msra.mxu0 %v74
    %915 = vmatpush.msra.mxu0 %v71
    %916 = vmatpush.msra.mxu0 %v68
    %917 = vmatpush.msra.mxu0 %v65
    %918 = vmatmul.f32.gmra.mxu0 %v857
    %v919 = vpop.f32.mrf.mxu0
    %v920 = vadd.f32 0.0, %v919
    %921 = vdwg.mxu0
    %v922 = vadd.f32 %v859, %v880
    %v923 = vxor.u32 %v922, 2147483648
    %v924 = vmul.f32 %v923, 1.442695
    %v925 = vpow.pop %v924
    %v926 = vadd.f32 %v925, 1.0
    %v927 = vrcp.pop %v926
    %v928 = vmul.f32 %v926, %v927
    %v929 = vsub.f32 1.0, %v928
    %v930 = vmul.f32 %v927, %v929
    %v931 = vadd.f32 %v927, %v930
    %vm932 = vweird.f32 %v926
    %vm933 = vweird.f32 %v927
    %vm934 = vmor %vm932, %vm933
    %v935 = vsel %vm934, %v927, %v931
    %v936 = vand.u32 2147483647, %v926
    %vm937 = vcmp.eq.f32.partialorder %v936, 8.507059e+37
    %v938 = vand.u32 %v926, 2147483648
    %v939 = vor.u32 1.1754944e-38, %v938
    %v940 = vsel %vm937, %v939, %v935
    %v941 = vmul.f32 1.0, %v940
    %v942 = vadd.f32 %v860, %v900
    %v943 = vxor.u32 %v942, 2147483648
    %v944 = vmul.f32 %v943, 1.442695
    %v945 = vpow.pop %v944
    %v946 = vadd.f32 %v945, 1.0
    %v947 = vrcp.pop %v946
    %v948 = vmul.f32 %v946, %v947
    %v949 = vsub.f32 1.0, %v948
    %v950 = vmul.f32 %v947, %v949
    %v951 = vadd.f32 %v947, %v950
    %vm952 = vweird.f32 %v946
    %vm953 = vweird.f32 %v947
    %vm954 = vmor %vm952, %vm953
    %v955 = vsel %vm954, %v947, %v951
    %v956 = vand.u32 2147483647, %v946
    %vm957 = vcmp.eq.f32.partialorder %v956, 8.507059e+37
    %v958 = vand.u32 %v946, 2147483648
    %v959 = vor.u32 1.1754944e-38, %v958
    %v960 = vsel %vm957, %v959, %v955
    %v961 = vmul.f32 1.0, %v960
    %v962 = vadd.f32 %v920, %v218
    %v963 = vmul.f32 %v941, %v962
    %v964 = vadd.f32 %v861, %v963
    %v965 = vtanh.pop %v964
    %v966 = vsub.f32 1.0, %v961
    %v967 = vmul.f32 %v966, %v965
    %v968 = vmul.f32 %v961, %v857
    %v969 = vadd.f32 %v967, %v968
    %s970 = sadd.s32 %s112, 6
    %v971 = vstv %s970
    %vm972 = vcmp.lt.s32.totalorder %v971, %v62
    %v973 = vsel %vm972, 1, 0
    %974 = vset.pattern.permute.xlu0 0
    %975 = vperm.xlu0 %974, %v973
    %v976 = vpop.permute.xlu0 %975
    %vm977 = vcmp.eq.s32.totalorder %v976, 1
    %v978 = vsel %vm977, %v969, 0.0
    %s979 = scalar_lea.vmem [#allocation8], 48
    %980 = vst [vmem:[%s979] sm:$0xff] %v978
    %v981 = vsel %vm977, %v969, %v857
    %s982 = scalar_lea.vmem [#allocation3], 168
    %v983 = vld [vmem:[%s982] sm:$0xff]
    %v984 = vld [vmem:[%s982 + $0x8] sm:$0xff]
    %v985 = vld [vmem:[%s982 + $0x10] sm:$0xff]
    %986 = vmatpush.msra.mxu0 %v108
    %987 = vmatpush.msra.mxu0 %v105
    %988 = vmatpush.msra.mxu0 %v102
    %989 = vmatpush.msra.mxu0 %v99
    %990 = vmatpush.msra.mxu0 %v96
    %991 = vmatpush.msra.mxu0 %v93
    %992 = vmatpush.msra.mxu0 %v90
    %993 = vmatpush.msra.mxu0 %v87
    %994 = vmatpush.msra.mxu0 %v84
    %995 = vmatpush.msra.mxu0 %v81
    %996 = vmatpush.msra.mxu0 %v78
    %997 = vmatpush.msra.mxu0 %v75
    %998 = vmatpush.msra.mxu0 %v72
    %999 = vmatpush.msra.mxu0 %v69
    %1000 = vmatpush.msra.mxu0 %v66
    %1001 = vmatpush.msra.mxu0 %v63
    %1002 = vmatmul.f32.gmra.mxu0 %v981
    %v1003 = vpop.f32.mrf.mxu0
    %v1004 = vadd.f32 0.0, %v1003
    %1005 = vdwg.mxu0
    %1006 = vmatpush.msra.mxu0 %v109
    %1007 = vmatpush.msra.mxu0 %v106
    %1008 = vmatpush.msra.mxu0 %v103
    %1009 = vmatpush.msra.mxu0 %v100
    %1010 = vmatpush.msra.mxu0 %v97
    %1011 = vmatpush.msra.mxu0 %v94
    %1012 = vmatpush.msra.mxu0 %v91
    %1013 = vmatpush.msra.mxu0 %v88
    %1014 = vmatpush.msra.mxu0 %v85
    %1015 = vmatpush.msra.mxu0 %v82
    %1016 = vmatpush.msra.mxu0 %v79
    %1017 = vmatpush.msra.mxu0 %v76
    %1018 = vmatpush.msra.mxu0 %v73
    %1019 = vmatpush.msra.mxu0 %v70
    %1020 = vmatpush.msra.mxu0 %v67
    %1021 = vmatpush.msra.mxu0 %v64
    %1022 = vmatmul.f32.gmra.mxu0 %v981
    %v1023 = vpop.f32.mrf.mxu0
    %v1024 = vadd.f32 0.0, %v1023
    %1025 = vdwg.mxu0
    %1026 = vmatpush.msra.mxu0 %v110
    %1027 = vmatpush.msra.mxu0 %v107
    %1028 = vmatpush.msra.mxu0 %v104
    %1029 = vmatpush.msra.mxu0 %v101
    %1030 = vmatpush.msra.mxu0 %v98
    %1031 = vmatpush.msra.mxu0 %v95
    %1032 = vmatpush.msra.mxu0 %v92
    %1033 = vmatpush.msra.mxu0 %v89
    %1034 = vmatpush.msra.mxu0 %v86
    %1035 = vmatpush.msra.mxu0 %v83
    %1036 = vmatpush.msra.mxu0 %v80
    %1037 = vmatpush.msra.mxu0 %v77
    %1038 = vmatpush.msra.mxu0 %v74
    %1039 = vmatpush.msra.mxu0 %v71
    %1040 = vmatpush.msra.mxu0 %v68
    %1041 = vmatpush.msra.mxu0 %v65
    %1042 = vmatmul.f32.gmra.mxu0 %v981
    %v1043 = vpop.f32.mrf.mxu0
    %v1044 = vadd.f32 0.0, %v1043
    %1045 = vdwg.mxu0
    %v1046 = vadd.f32 %v983, %v1004
    %v1047 = vxor.u32 %v1046, 2147483648
    %v1048 = vmul.f32 %v1047, 1.442695
    %v1049 = vpow.pop %v1048
    %v1050 = vadd.f32 %v1049, 1.0
    %v1051 = vrcp.pop %v1050
    %v1052 = vmul.f32 %v1050, %v1051
    %v1053 = vsub.f32 1.0, %v1052
    %v1054 = vmul.f32 %v1051, %v1053
    %v1055 = vadd.f32 %v1051, %v1054
    %vm1056 = vweird.f32 %v1050
    %vm1057 = vweird.f32 %v1051
    %vm1058 = vmor %vm1056, %vm1057
    %v1059 = vsel %vm1058, %v1051, %v1055
    %v1060 = vand.u32 2147483647, %v1050
    %vm1061 = vcmp.eq.f32.partialorder %v1060, 8.507059e+37
    %v1062 = vand.u32 %v1050, 2147483648
    %v1063 = vor.u32 1.1754944e-38, %v1062
    %v1064 = vsel %vm1061, %v1063, %v1059
    %v1065 = vmul.f32 1.0, %v1064
    %v1066 = vadd.f32 %v984, %v1024
    %v1067 = vxor.u32 %v1066, 2147483648
    %v1068 = vmul.f32 %v1067, 1.442695
    %v1069 = vpow.pop %v1068
    %v1070 = vadd.f32 %v1069, 1.0
    %v1071 = vrcp.pop %v1070
    %v1072 = vmul.f32 %v1070, %v1071
    %v1073 = vsub.f32 1.0, %v1072
    %v1074 = vmul.f32 %v1071, %v1073
    %v1075 = vadd.f32 %v1071, %v1074
    %vm1076 = vweird.f32 %v1070
    %vm1077 = vweird.f32 %v1071
    %vm1078 = vmor %vm1076, %vm1077
    %v1079 = vsel %vm1078, %v1071, %v1075
    %v1080 = vand.u32 2147483647, %v1070
    %vm1081 = vcmp.eq.f32.partialorder %v1080, 8.507059e+37
    %v1082 = vand.u32 %v1070, 2147483648
    %v1083 = vor.u32 1.1754944e-38, %v1082
    %v1084 = vsel %vm1081, %v1083, %v1079
    %v1085 = vmul.f32 1.0, %v1084
    %v1086 = vadd.f32 %v1044, %v218
    %v1087 = vmul.f32 %v1065, %v1086
    %v1088 = vadd.f32 %v985, %v1087
    %v1089 = vtanh.pop %v1088
    %v1090 = vsub.f32 1.0, %v1085
    %v1091 = vmul.f32 %v1090, %v1089
    %v1092 = vmul.f32 %v1085, %v981
    %v1093 = vadd.f32 %v1091, %v1092
    %s1094 = sadd.s32 %s112, 7
    %v1095 = vstv %s1094
    %vm1096 = vcmp.lt.s32.totalorder %v1095, %v62
    %v1097 = vsel %vm1096, 1, 0
    %1098 = vset.pattern.permute.xlu0 0
    %1099 = vperm.xlu0 %1098, %v1097
    %v1100 = vpop.permute.xlu0 %1099
    %vm1101 = vcmp.eq.s32.totalorder %v1100, 1
    %v1102 = vsel %vm1101, %v1093, 0.0
    %s1103 = scalar_lea.vmem [#allocation8], 56
    %1104 = vst [vmem:[%s1103] sm:$0xff] %v1102
    %v1105 = vsel %vm1101, %v1093, %v981
    %1106 = vst [vmem:[#allocation2] sm:$0xff] %v1105
    %1107 = vst [vmem:[#allocation9] sm:$0xff] %v1105
    // Predicated region
    $region34: #{tpu_custom_call.1} parent=1 // pred_check
      _
    $region35: #{tpu_custom_call.1} parent=1 // pred_check_branch
      %1109 = sbr.rel (0) target = $region37
    $region36: #{tpu_custom_call.1} parent=1 // pred_region
      %1111 = vsyncadd [#allocation5], 0
      %s1112 = sshll.u32 [#allocation8], 4
      %s1113 = int_to_ptr.vmem [resolvable:$true] %s1112
      %s1114 = sshll.u32 %s5, 4
      %s1115 = int_to_ptr.hbm [resolvable:$true] %s1114
      %1120 = dma.vmem_to_hbm [thread:$0]  %s1113, 1024, %s1115, [#allocation5], 128, 128, 8
    $region37: #{tpu_custom_call.1} parent=1 // pred_fallthru
      _
    // Predicated region
    $region38: #{tpu_custom_call.1} parent=1 // pred_check
      _
    $region39: #{tpu_custom_call.1} parent=1 // pred_check_branch
      %1122 = sbr.rel (0) target = $region41
    $region40: #{tpu_custom_call.1} parent=1 // pred_region
      %1124 = vsyncadd [#allocation10], 0
      %s1126 = sshll.u32 [#allocation9], 4
      %s1127 = int_to_ptr.vmem [resolvable:$true] %s1126
      %s1128 = sshll.u32 %s6, 4
      %s1129 = int_to_ptr.hbm [resolvable:$true] %s1128
      %1131 = dma.vmem_to_hbm [thread:$0]  %s1127, 128, %s1129, [#allocation10]
    $region41: #{tpu_custom_call.1} parent=1 // pred_fallthru
      _
    // Predicated region
    $region42: #{tpu_custom_call.1} parent=1 // pred_check
      _
    $region43: #{tpu_custom_call.1} parent=1 // pred_check_branch
      %1133 = sbr.rel (0) target = $region45
    $region44: #{tpu_custom_call.1} parent=1 // pred_region
      %1135 = dma.done [#allocation5], 1024
    $region45: #{tpu_custom_call.1} parent=1 // pred_fallthru
      _
    // Predicated region
    $region46: #{tpu_custom_call.1} parent=1 // pred_check
      _
    $region47: #{tpu_custom_call.1} parent=1 // pred_check_branch
      %1137 = sbr.rel (0) target = $region49
    $region48: #{tpu_custom_call.1} parent=1 // pred_region
      %1139 = dma.done [#allocation10], 128
    $region49: #{tpu_custom_call.1} parent=1 // pred_fallthru
      _
    %1140 = vsyncpa [#allocation4], 1
    %1141 = vsyncpa [#allocation7], 1
    %1142 = vsyncpa [#allocation5], 1
    %1143 = vsyncpa [#allocation10], 1

</llo_original>
